<compile_context>
chip_gen: v5e
topology: v5e:2x2
jax: 0.10.0
libtpu: 0.0.40
codegen_flags: <defaults>
</compile_context>

<pallas_src>
import functools

import jax
import jax.numpy as jnp
import numpy as np
from jax.experimental import pallas as pl
from jax.experimental.pallas import tpu as pltpu


# ----------------------------- Pallas kernel ---------------------------------
def _fused_flow_kernel(x_ref, w1_ref, b1_ref, w2_ref, b2_ref, r_ref,
                       *out_refs, n_flows):
    """All coupling flows for one batch tile, batch-on-lanes layout.

    x_ref  : (D, tm)       transposed batch tile (batch on the lane axis)
    w1_ref : (F, 2nh, D)   fused [s|t] first layer, even/odd gather folded in
    b1_ref : (F, 2nh, 1)
    w2_ref : (F, 2D, 2nh)  rows = [s_full ; t_full] in output order; zero rows
                           (and zero bias) at the untouched half
    b2_ref : (F, 2D, 1)
    r_ref  : (D, D)        constant de-interleave permutation (exact 0/1 copy)
    out_refs[:n_flows] : (D, tm)  per-flow outputs (transposed)
    out_refs[n_flows]  : (1, tm)  accumulated log|det J|
    """
    d = x_ref.shape[0]
    xT = x_ref[...]                                    # (d, tm)
    r = r_ref[...]
    ld = jnp.zeros((1, xT.shape[1]), jnp.float32)

    for f in range(n_flows):                           # small static unroll
        # Gather input columns into output order [cond-half ; trans-half].
        # Exact copy: 0/1 matrix, f32 multi-pass MXU matmul.
        xr = jnp.dot(r, xT, preferred_element_type=jnp.float32)

        # Fused [s|t] conditioner MLP (LeakyReLU 0.2); all lane-dense.
        h = jnp.dot(w1_ref[f], xT, preferred_element_type=jnp.float32) + b1_ref[f]
        h = jnp.where(h >= 0, h, 0.2 * h)
        st = jnp.dot(w2_ref[f], h, preferred_element_type=jnp.float32) + b2_ref[f]
        s_full = st[:d, :]                             # s at transformed rows, 0 elsewhere
        t_full = st[d:, :]

        # Untouched rows: exp(0) * x + 0 == x exactly.
        xT = jnp.exp(s_full) * xr + t_full
        ld = ld + jnp.sum(s_full, axis=0, keepdims=True)
        out_refs[f][...] = xT                          # lane-dense, once per flow

    out_refs[n_flows][...] = ld                        # lane-dense log_det store


# ---------------------- parameter fusion (host-side, once) --------------------
def build_fused_params(flow_params, parities, d):
    """Pack per-flow (w1s,b1s,w2s,b2s,w1t,b1t,w2t,b2t) + parity into stacked,
    transposed, gather-folded tensors.  Built with exact indexing (no matmuls)
    so the fused weights equal the originals bit-for-bit."""
    dh = d // 2
    f32 = jnp.float32

    # Constant de-interleave: row r of (R @ x^T) is x[:, 2r] for r < dh and
    # x[:, 2(r-dh)+1] otherwise, i.e. [even cols ; odd cols] in output order.
    perm = np.concatenate([np.arange(0, d, 2), np.arange(1, d, 2)])
    R = jnp.zeros((d, d), f32).at[np.arange(d), perm].set(1.0)

    W1K, B1K, W2K, B2K = [], [], [], []
    for (w1s, b1s, w2s, b2s, w1t, b1t, w2t, b2t), parity in zip(flow_params,
                                                                parities):
        nh = w1s.shape[1]
        cond_cols = np.arange(1 if parity else 0, d, 2)      # conditioning half of x
        trans_rows = np.arange(dh) + (0 if parity else dh)   # output rows transformed

        # First layer: h = x @ W1f + b1  (even/odd gather folded into W1f).
        w1cat = jnp.concatenate([w1s, w1t], axis=1)          # (dh, 2nh) = [s | t]
        b1cat = jnp.concatenate([b1s, b1t], axis=1)          # (1, 2nh)
        w1f = jnp.zeros((d, 2 * nh), f32).at[cond_cols, :].set(w1cat)
        W1K.append(w1f.T)                                    # (2nh, d)
        B1K.append(b1cat.T)                                  # (2nh, 1)

        # Second layer: rows of [s_full ; t_full] in output order; zero rows
        # and zero bias at the untouched (cond) rows.
        w2s_full = jnp.zeros((d, nh), f32).at[trans_rows, :].set(w2s.T)
        w2t_full = jnp.zeros((d, nh), f32).at[trans_rows, :].set(w2t.T)
        zeros_nh = jnp.zeros((d, nh), f32)
        w2k = jnp.concatenate([
            jnp.concatenate([w2s_full, zeros_nh], axis=1),   # s rows read h_s only
            jnp.concatenate([zeros_nh, w2t_full], axis=1),   # t rows read h_t only
        ], axis=0)                                           # (2d, 2nh)
        b2s_full = jnp.zeros((d, 1), f32).at[trans_rows, :].set(b2s.T)
        b2t_full = jnp.zeros((d, 1), f32).at[trans_rows, :].set(b2t.T)
        W2K.append(w2k)
        B2K.append(jnp.concatenate([b2s_full, b2t_full], axis=0))   # (2d, 1)

    stack = lambda xs: jnp.stack(xs, axis=0)
    return stack(W1K), stack(B1K), stack(W2K), stack(B2K), R


# ------------------------------- forward wrapper ------------------------------
def normalizing_flow_forward(x, fused_params, *, tm=None):
    """NormalizingFlow.forward(x) -> (zs, log_det). Single fused pallas_call."""
    m, d = x.shape
    w1k, b1k, w2k, b2k, rk = fused_params
    n_flows = int(w1k.shape[0])
    nh2 = int(w1k.shape[1])                            # 2 * nh

    if tm is None:
        # grid >= 2 keeps both v7x TensorCores busy; on single-TC v5e/v6e the
        # extra grid step (~0.35us) is negligible for this latency-bound kernel.
        tm = m // 2 if (m >= 256 and m % 256 == 0) else m
    assert m % tm == 0, "batch must tile by tm"
    assert tm % 128 == 0 or tm == m, "batch tile must be lane-aligned (128)"

    xT = x.T                                            # (d, m): batch on lanes

    flops_row = 2 * (d * d + d * nh2 + nh2 * 2 * d) + 8 * d
    weight_bytes = sum(int(a.size) * 4 for a in fused_params)
    cost = pl.CostEstimate(
        flops=int(m * n_flows * flops_row),
        transcendentals=int(m * n_flows * d),
        bytes_accessed=int(4 * (m * d * (1 + n_flows) + m) + weight_bytes),
    )

    # Grid-invariant weights: tiny (<40 KiB), so the default double-buffered
    # constant-index BlockSpec is fine even on v7x's 64 MiB VMEM.
    full = lambda a: pl.BlockSpec(a.shape, lambda *_: (0,) * a.ndim)

    outs = pl.pallas_call(
        functools.partial(_fused_flow_kernel, n_flows=n_flows),
        out_shape=tuple(
            [jax.ShapeDtypeStruct((d, m), jnp.float32) for _ in range(n_flows)]
            + [jax.ShapeDtypeStruct((1, m), jnp.float32)]),
        grid_spec=pltpu.PrefetchScalarGridSpec(
            num_scalar_prefetch=0,
            grid=(m // tm,),
            in_specs=[
                pl.BlockSpec((d, tm), lambda i: (0, i)),        # x^T batch tile
                full(w1k), full(b1k), full(w2k), full(b2k),     # fused MLPs
                full(rk),                                       # de-interleave
            ],
            out_specs=tuple(
                [pl.BlockSpec((d, tm), lambda i: (0, i)) for _ in range(n_flows)]
                + [pl.BlockSpec((1, tm), lambda i: (0, i))]),
        ),
        compiler_params=pltpu.CompilerParams(
            dimension_semantics=("parallel",)),
        cost_estimate=cost,
    )(xT, w1k, b1k, w2k, b2k, rk)

    zs = [x] + [zT.T for zT in outs[:n_flows]]          # back to (m, d) row layout
    log_det = outs[n_flows][0]                          # (m,)
    return zs, log_det


# ------------------------------ Reference (pure JAX) --------------------------
def _reference_forward(x, flow_params, parities):
    HI = jax.lax.Precision.HIGHEST     # true-f32 matmuls, matching the kernel
    m, _ = x.shape
    log_det = jnp.zeros((m,), jnp.float32)
    zs = [x]
    for params, parity in zip(flow_params, parities):
        w1s, b1s, w2s, b2s, w1t, b1t, w2t, b2t = params
        x0, x1 = x[:, 0::2], x[:, 1::2]
        if parity:
            x0, x1 = x1, x0

        def mlp(inp, w1, b1, w2, b2):
            h = jnp.dot(inp, w1, precision=HI) + b1
            h = jnp.where(h >= 0, h, 0.2 * h)
            return jnp.dot(h, w2, precision=HI) + b2

        s = mlp(x0, w1s, b1s, w2s, b2s)
        t = mlp(x0, w1t, b1t, w2t, b2t)
        z0, z1 = x0, jnp.exp(s) * x1 + t
        if parity:
            z0, z1 = z1, z0
        x = jnp.concatenate([z0, z1], axis=1)
        log_det = log_det + jnp.sum(s, axis=1)
        zs.append(x)
    return zs, log_det


# --------------------------------- Setup --------------------------------------
def init_flow_params(key, dh, nh):
    ks = jax.random.split(key, 4)

    def lin(k, fan_in, fan_out):
        w = jax.random.normal(k, (fan_in, fan_out), jnp.float32) * 0.1
        b = jnp.zeros((1, fan_out), jnp.float32)
        return w, b

    w1s, b1s = lin(ks[0], dh, nh)
    w2s, b2s = lin(ks[1], nh, dh)
    w1t, b1t = lin(ks[2], dh, nh)
    w2t, b2t = lin(ks[3], nh, dh)
    return (w1s, b1s, w2s, b2s, w1t, b1t, w2t, b2t)


if __name__ == "__main__":
    M, D, NH, N_FLOWS = 512, 8, 32, 4      # batch, dim (even), hidden, #flows
    DH = D // 2

    root = jax.random.PRNGKey(0)
    k_x, k_p = jax.random.split(root)
    x = jax.random.normal(k_x, (M, D), jnp.float32)

    flow_keys = jax.random.split(k_p, N_FLOWS)
    flow_params = [init_flow_params(k, DH, NH) for k in flow_keys]
    parities = [i % 2 == 1 for i in range(N_FLOWS)]

    fused = build_fused_params(flow_params, parities, D)

    zs, log_det = normalizing_flow_forward(x, fused)
    jax.block_until_ready(log_det)
    for z in zs:
        jax.block_until_ready(z)

    zs_ref, log_det_ref = _reference_forward(x, flow_params, parities)
    # 1e-4: both sides are f32-accurate; margin covers MXU multi-pass vs XLA
    # dot accumulation-order differences.
    for z, zr in zip(zs, zs_ref):
        assert jnp.allclose(z, zr, atol=1e-4, rtol=1e-4)
    assert jnp.allclose(log_det, log_det_ref, atol=1e-4, rtol=1e-4)
    assert log_det.shape == (M,) and len(zs) == N_FLOWS + 1

    print("KERNEL_OK")
</pallas_src>

<mosaic_0001>
module attributes {stable_mosaic.version = 11 : i64} {
  func.func @_fused_flow_kernel(%arg0: i32, %arg1: memref<8x256xf32, #tpu.memory_space<vmem>>, %arg2: memref<4x64x8xf32, #tpu.memory_space<vmem>>, %arg3: memref<4x64x1xf32, #tpu.memory_space<vmem>>, %arg4: memref<4x16x64xf32, #tpu.memory_space<vmem>>, %arg5: memref<4x16x1xf32, #tpu.memory_space<vmem>>, %arg6: memref<8x8xf32, #tpu.memory_space<vmem>>, %arg7: memref<8x256xf32, #tpu.memory_space<vmem>>, %arg8: memref<8x256xf32, #tpu.memory_space<vmem>>, %arg9: memref<8x256xf32, #tpu.memory_space<vmem>>, %arg10: memref<8x256xf32, #tpu.memory_space<vmem>>, %arg11: memref<1x256xf32, #tpu.memory_space<vmem>>) attributes {dimension_semantics = [#tpu.dimension_semantics<parallel>], iteration_bounds = array<i64: 2>, scalar_prefetch = 0 : i64, scratch_operands = 0 : i64, tpu.core_type = #tpu.core_type<tc>, window_params = [{transform_indices = @transform_0, window_bounds = array<i64: 8, 256>}, {pipeline_mode = #tpu.pipeline_mode<synchronous>, transform_indices = @transform_1, window_bounds = array<i64: 4, 64, 8>}, {pipeline_mode = #tpu.pipeline_mode<synchronous>, transform_indices = @transform_2, window_bounds = array<i64: 4, 64, 1>}, {pipeline_mode = #tpu.pipeline_mode<synchronous>, transform_indices = @transform_3, window_bounds = array<i64: 4, 16, 64>}, {pipeline_mode = #tpu.pipeline_mode<synchronous>, transform_indices = @transform_4, window_bounds = array<i64: 4, 16, 1>}, {pipeline_mode = #tpu.pipeline_mode<synchronous>, transform_indices = @transform_5, window_bounds = array<i64: 8, 8>}, {transform_indices = @transform_6, window_bounds = array<i64: 8, 256>}, {transform_indices = @transform_7, window_bounds = array<i64: 8, 256>}, {transform_indices = @transform_8, window_bounds = array<i64: 8, 256>}, {transform_indices = @transform_9, window_bounds = array<i64: 8, 256>}, {transform_indices = @transform_10, window_bounds = array<i64: 1, 256>}]} {
    %c0 = arith.constant 0 : index
    %c0_0 = arith.constant 0 : index
    %0 = vector.load %arg1[%c0, %c0_0] : memref<8x256xf32, #tpu.memory_space<vmem>>, vector<8x256xf32>
    %c0_1 = arith.constant 0 : index
    %c0_2 = arith.constant 0 : index
    %1 = vector.load %arg6[%c0_1, %c0_2] : memref<8x8xf32, #tpu.memory_space<vmem>>, vector<8x8xf32>
    %cst = arith.constant 0.000000e+00 : f32
    %2 = vector.broadcast %cst : f32 to vector<1x256xf32>
    %cst_3 = arith.constant dense<0.000000e+00> : vector<8x256xf32>
    %3 = tpu.matmul %1, %0, %cst_3 {dimension_numbers = #tpu.dot_dimension_numbers<[1], [0], [0], [1], [0, 0, 1, 1], [], []>} : vector<8x8xf32>, vector<8x256xf32>, vector<8x256xf32> -> vector<8x256xf32>
    %c0_4 = arith.constant 0 : index
    %c0_5 = arith.constant 0 : index
    %c0_6 = arith.constant 0 : index
    %4 = vector.load %arg2[%c0_4, %c0_5, %c0_6] : memref<4x64x8xf32, #tpu.memory_space<vmem>>, vector<1x64x8xf32>
    %5 = vector.shape_cast %4 : vector<1x64x8xf32> to vector<64x8xf32>
    %cst_7 = arith.constant dense<0.000000e+00> : vector<64x256xf32>
    %6 = tpu.matmul %5, %0, %cst_7 {dimension_numbers = #tpu.dot_dimension_numbers<[1], [0], [0], [1], [0, 0, 1, 1], [], []>} : vector<64x8xf32>, vector<8x256xf32>, vector<64x256xf32> -> vector<64x256xf32>
    %c0_8 = arith.constant 0 : index
    %c0_9 = arith.constant 0 : index
    %c0_10 = arith.constant 0 : index
    %7 = vector.load %arg3[%c0_8, %c0_9, %c0_10] : memref<4x64x1xf32, #tpu.memory_space<vmem>>, vector<1x64x1xf32>
    %8 = vector.shape_cast %7 : vector<1x64x1xf32> to vector<64x1xf32>
    %9 = vector.broadcast %8 : vector<64x1xf32> to vector<64x256xf32>
    %10 = arith.addf %6, %9 : vector<64x256xf32>
    %cst_11 = arith.constant 0.000000e+00 : f32
    %11 = vector.broadcast %cst_11 : f32 to vector<64x256xf32>
    %12 = arith.cmpf oge, %10, %11 : vector<64x256xf32>
    %cst_12 = arith.constant 2.000000e-01 : f32
    %13 = vector.broadcast %cst_12 : f32 to vector<64x256xf32>
    %14 = arith.mulf %13, %10 : vector<64x256xf32>
    %15 = arith.select %12, %10, %14 : vector<64x256xi1>, vector<64x256xf32>
    %c0_13 = arith.constant 0 : index
    %c0_14 = arith.constant 0 : index
    %c0_15 = arith.constant 0 : index
    %16 = vector.load %arg4[%c0_13, %c0_14, %c0_15] : memref<4x16x64xf32, #tpu.memory_space<vmem>>, vector<1x16x64xf32>
    %17 = vector.shape_cast %16 : vector<1x16x64xf32> to vector<16x64xf32>
    %cst_16 = arith.constant dense<0.000000e+00> : vector<16x256xf32>
    %18 = tpu.matmul %17, %15, %cst_16 {dimension_numbers = #tpu.dot_dimension_numbers<[1], [0], [0], [1], [0, 0, 1, 1], [], []>} : vector<16x64xf32>, vector<64x256xf32>, vector<16x256xf32> -> vector<16x256xf32>
    %c0_17 = arith.constant 0 : index
    %c0_18 = arith.constant 0 : index
    %c0_19 = arith.constant 0 : index
    %19 = vector.load %arg5[%c0_17, %c0_18, %c0_19] : memref<4x16x1xf32, #tpu.memory_space<vmem>>, vector<1x16x1xf32>
    %20 = vector.shape_cast %19 : vector<1x16x1xf32> to vector<16x1xf32>
    %21 = vector.broadcast %20 : vector<16x1xf32> to vector<16x256xf32>
    %22 = arith.addf %18, %21 : vector<16x256xf32>
    %23 = vector.extract_strided_slice %22 {offsets = [0, 0], sizes = [8, 256], strides = [1, 1]} : vector<16x256xf32> to vector<8x256xf32>
    %24 = vector.extract_strided_slice %22 {offsets = [8, 0], sizes = [8, 256], strides = [1, 1]} : vector<16x256xf32> to vector<8x256xf32>
    %25 = math.exp %23 : vector<8x256xf32>
    %26 = arith.mulf %25, %3 : vector<8x256xf32>
    %27 = arith.addf %26, %24 : vector<8x256xf32>
    %cst_20 = arith.constant dense<0.000000e+00> : vector<256xf32>
    %28 = vector.multi_reduction <add>, %23, %cst_20 [0] : vector<8x256xf32> to vector<256xf32>
    %29 = vector.shape_cast %28 : vector<256xf32> to vector<1x256xf32>
    %30 = arith.addf %2, %29 : vector<1x256xf32>
    %c0_21 = arith.constant 0 : index
    %c0_22 = arith.constant 0 : index
    %31 = vector.load %arg7[%c0_21, %c0_22] : memref<8x256xf32, #tpu.memory_space<vmem>>, vector<8x256xf32>
    tpu.vector_store %arg7[%c0_21, %c0_22], %27 {strides = array<i32>} : memref<8x256xf32, #tpu.memory_space<vmem>>, vector<8x256xf32>,
    %cst_23 = arith.constant dense<0.000000e+00> : vector<8x256xf32>
    %32 = tpu.matmul %1, %27, %cst_23 {dimension_numbers = #tpu.dot_dimension_numbers<[1], [0], [0], [1], [0, 0, 1, 1], [], []>} : vector<8x8xf32>, vector<8x256xf32>, vector<8x256xf32> -> vector<8x256xf32>
    %c1 = arith.constant 1 : index
    %c0_24 = arith.constant 0 : index
    %c0_25 = arith.constant 0 : index
    %33 = vector.load %arg2[%c1, %c0_24, %c0_25] : memref<4x64x8xf32, #tpu.memory_space<vmem>>, vector<1x64x8xf32>
    %34 = vector.shape_cast %33 : vector<1x64x8xf32> to vector<64x8xf32>
    %cst_26 = arith.constant dense<0.000000e+00> : vector<64x256xf32>
    %35 = tpu.matmul %34, %27, %cst_26 {dimension_numbers = #tpu.dot_dimension_numbers<[1], [0], [0], [1], [0, 0, 1, 1], [], []>} : vector<64x8xf32>, vector<8x256xf32>, vector<64x256xf32> -> vector<64x256xf32>
    %c1_27 = arith.constant 1 : index
    %c0_28 = arith.constant 0 : index
    %c0_29 = arith.constant 0 : index
    %36 = vector.load %arg3[%c1_27, %c0_28, %c0_29] : memref<4x64x1xf32, #tpu.memory_space<vmem>>, vector<1x64x1xf32>
    %37 = vector.shape_cast %36 : vector<1x64x1xf32> to vector<64x1xf32>
    %38 = vector.broadcast %37 : vector<64x1xf32> to vector<64x256xf32>
    %39 = arith.addf %35, %38 : vector<64x256xf32>
    %cst_30 = arith.constant 0.000000e+00 : f32
    %40 = vector.broadcast %cst_30 : f32 to vector<64x256xf32>
    %41 = arith.cmpf oge, %39, %40 : vector<64x256xf32>
    %cst_31 = arith.constant 2.000000e-01 : f32
    %42 = vector.broadcast %cst_31 : f32 to vector<64x256xf32>
    %43 = arith.mulf %42, %39 : vector<64x256xf32>
    %44 = arith.select %41, %39, %43 : vector<64x256xi1>, vector<64x256xf32>
    %c1_32 = arith.constant 1 : index
    %c0_33 = arith.constant 0 : index
    %c0_34 = arith.constant 0 : index
    %45 = vector.load %arg4[%c1_32, %c0_33, %c0_34] : memref<4x16x64xf32, #tpu.memory_space<vmem>>, vector<1x16x64xf32>
    %46 = vector.shape_cast %45 : vector<1x16x64xf32> to vector<16x64xf32>
    %cst_35 = arith.constant dense<0.000000e+00> : vector<16x256xf32>
    %47 = tpu.matmul %46, %44, %cst_35 {dimension_numbers = #tpu.dot_dimension_numbers<[1], [0], [0], [1], [0, 0, 1, 1], [], []>} : vector<16x64xf32>, vector<64x256xf32>, vector<16x256xf32> -> vector<16x256xf32>
    %c1_36 = arith.constant 1 : index
    %c0_37 = arith.constant 0 : index
    %c0_38 = arith.constant 0 : index
    %48 = vector.load %arg5[%c1_36, %c0_37, %c0_38] : memref<4x16x1xf32, #tpu.memory_space<vmem>>, vector<1x16x1xf32>
    %49 = vector.shape_cast %48 : vector<1x16x1xf32> to vector<16x1xf32>
    %50 = vector.broadcast %49 : vector<16x1xf32> to vector<16x256xf32>
    %51 = arith.addf %47, %50 : vector<16x256xf32>
    %52 = vector.extract_strided_slice %51 {offsets = [0, 0], sizes = [8, 256], strides = [1, 1]} : vector<16x256xf32> to vector<8x256xf32>
    %53 = vector.extract_strided_slice %51 {offsets = [8, 0], sizes = [8, 256], strides = [1, 1]} : vector<16x256xf32> to vector<8x256xf32>
    %54 = math.exp %52 : vector<8x256xf32>
    %55 = arith.mulf %54, %32 : vector<8x256xf32>
    %56 = arith.addf %55, %53 : vector<8x256xf32>
    %cst_39 = arith.constant dense<0.000000e+00> : vector<256xf32>
    %57 = vector.multi_reduction <add>, %52, %cst_39 [0] : vector<8x256xf32> to vector<256xf32>
    %58 = vector.shape_cast %57 : vector<256xf32> to vector<1x256xf32>
    %59 = arith.addf %30, %58 : vector<1x256xf32>
    %c0_40 = arith.constant 0 : index
    %c0_41 = arith.constant 0 : index
    %60 = vector.load %arg8[%c0_40, %c0_41] : memref<8x256xf32, #tpu.memory_space<vmem>>, vector<8x256xf32>
    tpu.vector_store %arg8[%c0_40, %c0_41], %56 {strides = array<i32>} : memref<8x256xf32, #tpu.memory_space<vmem>>, vector<8x256xf32>,
    %cst_42 = arith.constant dense<0.000000e+00> : vector<8x256xf32>
    %61 = tpu.matmul %1, %56, %cst_42 {dimension_numbers = #tpu.dot_dimension_numbers<[1], [0], [0], [1], [0, 0, 1, 1], [], []>} : vector<8x8xf32>, vector<8x256xf32>, vector<8x256xf32> -> vector<8x256xf32>
    %c2 = arith.constant 2 : index
    %c0_43 = arith.constant 0 : index
    %c0_44 = arith.constant 0 : index
    %62 = vector.load %arg2[%c2, %c0_43, %c0_44] : memref<4x64x8xf32, #tpu.memory_space<vmem>>, vector<1x64x8xf32>
    %63 = vector.shape_cast %62 : vector<1x64x8xf32> to vector<64x8xf32>
    %cst_45 = arith.constant dense<0.000000e+00> : vector<64x256xf32>
    %64 = tpu.matmul %63, %56, %cst_45 {dimension_numbers = #tpu.dot_dimension_numbers<[1], [0], [0], [1], [0, 0, 1, 1], [], []>} : vector<64x8xf32>, vector<8x256xf32>, vector<64x256xf32> -> vector<64x256xf32>
    %c2_46 = arith.constant 2 : index
    %c0_47 = arith.constant 0 : index
    %c0_48 = arith.constant 0 : index
    %65 = vector.load %arg3[%c2_46, %c0_47, %c0_48] : memref<4x64x1xf32, #tpu.memory_space<vmem>>, vector<1x64x1xf32>
    %66 = vector.shape_cast %65 : vector<1x64x1xf32> to vector<64x1xf32>
    %67 = vector.broadcast %66 : vector<64x1xf32> to vector<64x256xf32>
    %68 = arith.addf %64, %67 : vector<64x256xf32>
    %cst_49 = arith.constant 0.000000e+00 : f32
    %69 = vector.broadcast %cst_49 : f32 to vector<64x256xf32>
    %70 = arith.cmpf oge, %68, %69 : vector<64x256xf32>
    %cst_50 = arith.constant 2.000000e-01 : f32
    %71 = vector.broadcast %cst_50 : f32 to vector<64x256xf32>
    %72 = arith.mulf %71, %68 : vector<64x256xf32>
    %73 = arith.select %70, %68, %72 : vector<64x256xi1>, vector<64x256xf32>
    %c2_51 = arith.constant 2 : index
    %c0_52 = arith.constant 0 : index
    %c0_53 = arith.constant 0 : index
    %74 = vector.load %arg4[%c2_51, %c0_52, %c0_53] : memref<4x16x64xf32, #tpu.memory_space<vmem>>, vector<1x16x64xf32>
    %75 = vector.shape_cast %74 : vector<1x16x64xf32> to vector<16x64xf32>
    %cst_54 = arith.constant dense<0.000000e+00> : vector<16x256xf32>
    %76 = tpu.matmul %75, %73, %cst_54 {dimension_numbers = #tpu.dot_dimension_numbers<[1], [0], [0], [1], [0, 0, 1, 1], [], []>} : vector<16x64xf32>, vector<64x256xf32>, vector<16x256xf32> -> vector<16x256xf32>
    %c2_55 = arith.constant 2 : index
    %c0_56 = arith.constant 0 : index
    %c0_57 = arith.constant 0 : index
    %77 = vector.load %arg5[%c2_55, %c0_56, %c0_57] : memref<4x16x1xf32, #tpu.memory_space<vmem>>, vector<1x16x1xf32>
    %78 = vector.shape_cast %77 : vector<1x16x1xf32> to vector<16x1xf32>
    %79 = vector.broadcast %78 : vector<16x1xf32> to vector<16x256xf32>
    %80 = arith.addf %76, %79 : vector<16x256xf32>
    %81 = vector.extract_strided_slice %80 {offsets = [0, 0], sizes = [8, 256], strides = [1, 1]} : vector<16x256xf32> to vector<8x256xf32>
    %82 = vector.extract_strided_slice %80 {offsets = [8, 0], sizes = [8, 256], strides = [1, 1]} : vector<16x256xf32> to vector<8x256xf32>
    %83 = math.exp %81 : vector<8x256xf32>
    %84 = arith.mulf %83, %61 : vector<8x256xf32>
    %85 = arith.addf %84, %82 : vector<8x256xf32>
    %cst_58 = arith.constant dense<0.000000e+00> : vector<256xf32>
    %86 = vector.multi_reduction <add>, %81, %cst_58 [0] : vector<8x256xf32> to vector<256xf32>
    %87 = vector.shape_cast %86 : vector<256xf32> to vector<1x256xf32>
    %88 = arith.addf %59, %87 : vector<1x256xf32>
    %c0_59 = arith.constant 0 : index
    %c0_60 = arith.constant 0 : index
    %89 = vector.load %arg9[%c0_59, %c0_60] : memref<8x256xf32, #tpu.memory_space<vmem>>, vector<8x256xf32>
    tpu.vector_store %arg9[%c0_59, %c0_60], %85 {strides = array<i32>} : memref<8x256xf32, #tpu.memory_space<vmem>>, vector<8x256xf32>,
    %cst_61 = arith.constant dense<0.000000e+00> : vector<8x256xf32>
    %90 = tpu.matmul %1, %85, %cst_61 {dimension_numbers = #tpu.dot_dimension_numbers<[1], [0], [0], [1], [0, 0, 1, 1], [], []>} : vector<8x8xf32>, vector<8x256xf32>, vector<8x256xf32> -> vector<8x256xf32>
    %c3 = arith.constant 3 : index
    %c0_62 = arith.constant 0 : index
    %c0_63 = arith.constant 0 : index
    %91 = vector.load %arg2[%c3, %c0_62, %c0_63] : memref<4x64x8xf32, #tpu.memory_space<vmem>>, vector<1x64x8xf32>
    %92 = vector.shape_cast %91 : vector<1x64x8xf32> to vector<64x8xf32>
    %cst_64 = arith.constant dense<0.000000e+00> : vector<64x256xf32>
    %93 = tpu.matmul %92, %85, %cst_64 {dimension_numbers = #tpu.dot_dimension_numbers<[1], [0], [0], [1], [0, 0, 1, 1], [], []>} : vector<64x8xf32>, vector<8x256xf32>, vector<64x256xf32> -> vector<64x256xf32>
    %c3_65 = arith.constant 3 : index
    %c0_66 = arith.constant 0 : index
    %c0_67 = arith.constant 0 : index
    %94 = vector.load %arg3[%c3_65, %c0_66, %c0_67] : memref<4x64x1xf32, #tpu.memory_space<vmem>>, vector<1x64x1xf32>
    %95 = vector.shape_cast %94 : vector<1x64x1xf32> to vector<64x1xf32>
    %96 = vector.broadcast %95 : vector<64x1xf32> to vector<64x256xf32>
    %97 = arith.addf %93, %96 : vector<64x256xf32>
    %cst_68 = arith.constant 0.000000e+00 : f32
    %98 = vector.broadcast %cst_68 : f32 to vector<64x256xf32>
    %99 = arith.cmpf oge, %97, %98 : vector<64x256xf32>
    %cst_69 = arith.constant 2.000000e-01 : f32
    %100 = vector.broadcast %cst_69 : f32 to vector<64x256xf32>
    %101 = arith.mulf %100, %97 : vector<64x256xf32>
    %102 = arith.select %99, %97, %101 : vector<64x256xi1>, vector<64x256xf32>
    %c3_70 = arith.constant 3 : index
    %c0_71 = arith.constant 0 : index
    %c0_72 = arith.constant 0 : index
    %103 = vector.load %arg4[%c3_70, %c0_71, %c0_72] : memref<4x16x64xf32, #tpu.memory_space<vmem>>, vector<1x16x64xf32>
    %104 = vector.shape_cast %103 : vector<1x16x64xf32> to vector<16x64xf32>
    %cst_73 = arith.constant dense<0.000000e+00> : vector<16x256xf32>
    %105 = tpu.matmul %104, %102, %cst_73 {dimension_numbers = #tpu.dot_dimension_numbers<[1], [0], [0], [1], [0, 0, 1, 1], [], []>} : vector<16x64xf32>, vector<64x256xf32>, vector<16x256xf32> -> vector<16x256xf32>
    %c3_74 = arith.constant 3 : index
    %c0_75 = arith.constant 0 : index
    %c0_76 = arith.constant 0 : index
    %106 = vector.load %arg5[%c3_74, %c0_75, %c0_76] : memref<4x16x1xf32, #tpu.memory_space<vmem>>, vector<1x16x1xf32>
    %107 = vector.shape_cast %106 : vector<1x16x1xf32> to vector<16x1xf32>
    %108 = vector.broadcast %107 : vector<16x1xf32> to vector<16x256xf32>
    %109 = arith.addf %105, %108 : vector<16x256xf32>
    %110 = vector.extract_strided_slice %109 {offsets = [0, 0], sizes = [8, 256], strides = [1, 1]} : vector<16x256xf32> to vector<8x256xf32>
    %111 = vector.extract_strided_slice %109 {offsets = [8, 0], sizes = [8, 256], strides = [1, 1]} : vector<16x256xf32> to vector<8x256xf32>
    %112 = math.exp %110 : vector<8x256xf32>
    %113 = arith.mulf %112, %90 : vector<8x256xf32>
    %114 = arith.addf %113, %111 : vector<8x256xf32>
    %cst_77 = arith.constant dense<0.000000e+00> : vector<256xf32>
    %115 = vector.multi_reduction <add>, %110, %cst_77 [0] : vector<8x256xf32> to vector<256xf32>
    %116 = vector.shape_cast %115 : vector<256xf32> to vector<1x256xf32>
    %117 = arith.addf %88, %116 : vector<1x256xf32>
    %c0_78 = arith.constant 0 : index
    %c0_79 = arith.constant 0 : index
    %118 = vector.load %arg10[%c0_78, %c0_79] : memref<8x256xf32, #tpu.memory_space<vmem>>, vector<8x256xf32>
    tpu.vector_store %arg10[%c0_78, %c0_79], %114 {strides = array<i32>} : memref<8x256xf32, #tpu.memory_space<vmem>>, vector<8x256xf32>,
    %c0_80 = arith.constant 0 : index
    %c0_81 = arith.constant 0 : index
    %119 = vector.load %arg11[%c0_80, %c0_81] : memref<1x256xf32, #tpu.memory_space<vmem>>, vector<1x256xf32>
    tpu.vector_store %arg11[%c0_80, %c0_81], %117 {strides = array<i32>} : memref<1x256xf32, #tpu.memory_space<vmem>>, vector<1x256xf32>,
    return
  }
  func.func @transform_0(%arg0: i32) -> (i32, i32) {
    %c0_i32 = arith.constant 0 : i32
    %c0_i32_0 = arith.constant 0 : i32
    return %c0_i32, %arg0 : i32, i32
  }
  func.func @transform_1(%arg0: i32) -> (i32, i32, i32) {
    %c0_i32 = arith.constant 0 : i32
    %c0_i32_0 = arith.constant 0 : i32
    %c0_i32_1 = arith.constant 0 : i32
    %c0_i32_2 = arith.constant 0 : i32
    return %c0_i32, %c0_i32_0, %c0_i32_1 : i32, i32, i32
  }
  func.func @transform_2(%arg0: i32) -> (i32, i32, i32) {
    %c0_i32 = arith.constant 0 : i32
    %c0_i32_0 = arith.constant 0 : i32
    %c0_i32_1 = arith.constant 0 : i32
    %c0_i32_2 = arith.constant 0 : i32
    return %c0_i32, %c0_i32_0, %c0_i32_1 : i32, i32, i32
  }
  func.func @transform_3(%arg0: i32) -> (i32, i32, i32) {
    %c0_i32 = arith.constant 0 : i32
    %c0_i32_0 = arith.constant 0 : i32
    %c0_i32_1 = arith.constant 0 : i32
    %c0_i32_2 = arith.constant 0 : i32
    return %c0_i32, %c0_i32_0, %c0_i32_1 : i32, i32, i32
  }
  func.func @transform_4(%arg0: i32) -> (i32, i32, i32) {
    %c0_i32 = arith.constant 0 : i32
    %c0_i32_0 = arith.constant 0 : i32
    %c0_i32_1 = arith.constant 0 : i32
    %c0_i32_2 = arith.constant 0 : i32
    return %c0_i32, %c0_i32_0, %c0_i32_1 : i32, i32, i32
  }
  func.func @transform_5(%arg0: i32) -> (i32, i32) {
    %c0_i32 = arith.constant 0 : i32
    %c0_i32_0 = arith.constant 0 : i32
    %c0_i32_1 = arith.constant 0 : i32
    return %c0_i32, %c0_i32_0 : i32, i32
  }
  func.func @transform_6(%arg0: i32) -> (i32, i32) {
    %c0_i32 = arith.constant 0 : i32
    %c0_i32_0 = arith.constant 0 : i32
    return %c0_i32, %arg0 : i32, i32
  }
  func.func @transform_7(%arg0: i32) -> (i32, i32) {
    %c0_i32 = arith.constant 0 : i32
    %c0_i32_0 = arith.constant 0 : i32
    return %c0_i32, %arg0 : i32, i32
  }
  func.func @transform_8(%arg0: i32) -> (i32, i32) {
    %c0_i32 = arith.constant 0 : i32
    %c0_i32_0 = arith.constant 0 : i32
    return %c0_i32, %arg0 : i32, i32
  }
  func.func @transform_9(%arg0: i32) -> (i32, i32) {
    %c0_i32 = arith.constant 0 : i32
    %c0_i32_0 = arith.constant 0 : i32
    return %c0_i32, %arg0 : i32, i32
  }
  func.func @transform_10(%arg0: i32) -> (i32, i32) {
    %c0_i32 = arith.constant 0 : i32
    %c0_i32_0 = arith.constant 0 : i32
    return %c0_i32, %arg0 : i32, i32
  }
}

</mosaic_0001>

<llo_original>
// kernel: tpu_custom_call.1
$region0: #{tpu_custom_call.1}
  #allocation0 [shape = 'u32[]', space=smem, size = 0x4, offset = 0x4, fixed_abs, tag = 'smem constant byte address 0x4 - core index']
  #allocation1 [shape = 'u32[72,128]{1,0:T(1,128)}', space=vmem, size = 0x9000, scoped, tag = 'internal scratch']
  %s0 = inlined_call_operand.vmem [shape: f32[8,512], index: 0, kind: input, shape index: {}]
  %s1 = inlined_call_operand.vmem [shape: f32[4,64,8], index: 1, kind: input, shape index: {}]
  %s2 = inlined_call_operand.vmem [shape: f32[4,64,1], index: 2, kind: input, shape index: {}]
  %s3 = inlined_call_operand.vmem [shape: f32[4,16,64], index: 3, kind: input, shape index: {}]
  %s4 = inlined_call_operand.vmem [shape: f32[4,16,1], index: 4, kind: input, shape index: {}]
  %s5 = inlined_call_operand.vmem [shape: f32[8,8], index: 5, kind: input, shape index: {}]
  %s6 = inlined_call_operand.hbm [shape: f32[8,512], index: 6, kind: output, shape index: {0}]
  %s7 = inlined_call_operand.hbm [shape: f32[8,512], index: 7, kind: output, shape index: {1}]
  %s8 = inlined_call_operand.hbm [shape: f32[8,512], index: 8, kind: output, shape index: {2}]
  %s9 = inlined_call_operand.hbm [shape: f32[8,512], index: 9, kind: output, shape index: {3}]
  %s10 = inlined_call_operand.hbm [shape: f32[1,512], index: 10, kind: output, shape index: {4}]
  %11 = xla_tuple %s6, %s7, %s8, %s9, %s10
  %s12 = sld [smem:[#allocation0]]
  $region89: #{tpu_custom_call.1} parent=0
    _
  %s14 = ssub.s32 1, %s12
  %s15 = scalar_select 0, %s14, %s12
  $region1: #{tpu_custom_call.1} parent=0
    #allocation2 [shape = 'u8[16384]{0}', space=vmem, size = 0x4000, scoped, tag = 'output window, operand 0']
    #allocation3 [shape = 's32[2]{0}', space=sflag, size = 0x8, scoped, tag = 'scoped memory for tpu_custom_call.1']
    #allocation4 [shape = 'u8[16384]{0}', space=vmem, size = 0x4000, scoped, tag = 'output window, operand 1']
    #allocation5 [shape = 's32[2]{0}', space=sflag, size = 0x8, scoped, tag = 'scoped memory for tpu_custom_call.1']
    #allocation6 [shape = 'u8[16384]{0}', space=vmem, size = 0x4000, scoped, tag = 'output window, operand 2']
    #allocation7 [shape = 'u8[16384]{0}', space=vmem, size = 0x4000, scoped, tag = 'output window, operand 3']
    #allocation8 [shape = 's32[2]{0}', space=sflag, size = 0x8, scoped, tag = 'scoped memory for tpu_custom_call.1']
    #allocation9 [shape = 'u8[2048]{0}', space=vmem, size = 0x800, scoped, tag = 'output window, operand 4']
    %16 = vsyncpa [#allocation3], 0
    %s17 = scalar_lea.sflag [#allocation3], 1
    %18 = vsyncpa %s17, 0
    %19 = vsyncpa [#allocation5], 0
    %s20 = scalar_lea.sflag [#allocation5], 1
    %21 = vsyncpa %s20, 0
    %22 = vsyncpa [#allocation8], 0
    %s23 = scalar_lea.sflag [#allocation8], 1
    %24 = vsyncpa %s23, 0
    loop: start=0, step=1, limit=4
    $region2: #{tpu_custom_call.1} parent=1 // loop_pre_header
      _
    $region3: #{tpu_custom_call.1} parent=1 // loop_header
      %s26 = sphi 0, %s30
      %p27 = scmp.ge.s32.totalorder %s26, 4
      %s36 = sphi 0, %s38
      %s39 = sphi 0, %s36
      %s40 = sphi 0, %s39
      %s56 = sphi 0, %s40
      %s60 = sphi 0, %s60
      %s62 = sphi 0, %s60
      %s63 = sphi 0, %s62
      %s77 = sphi 0, %s63
      %s81 = sphi 0, %s81
      %s83 = sphi 0, %s81
      %s84 = sphi 0, %s83
      %s98 = sphi 0, %s84
      %s102 = sphi 0, %s102
      %s104 = sphi 0, %s102
      %s105 = sphi 0, %s104
      %s119 = sphi 0, %s105
      %s123 = sphi 0, %s123
      %s125 = sphi 0, %s123
      %s126 = sphi 0, %s125
      %s140 = sphi 0, %s126
      %s144 = sphi 0, %s144
      %s146 = sphi 0, %s144
      %s147 = sphi 0, %s146
      %s161 = sphi 0, %s147
      %s167 = sphi 0, %s169
      %s170 = sphi 0, %s167
      %s171 = sphi 0, %s170
      %s187 = sphi 0, %s171
      %s193 = sphi 0, %s195
      %s196 = sphi 0, %s193
      %s197 = sphi 0, %s196
      %s213 = sphi 0, %s197
      %s219 = sphi 0, %s221
      %s222 = sphi 0, %s219
      %s223 = sphi 0, %s222
      %s239 = sphi 0, %s223
      %s245 = sphi 0, %s247
      %s248 = sphi 0, %s245
      %s249 = sphi 0, %s248
      %s265 = sphi 0, %s249
      %s271 = sphi 0, %s273
      %s274 = sphi 0, %s271
      %s275 = sphi 0, %s274
      %s291 = sphi 0, %s275
    $region4: #{tpu_custom_call.1} parent=1 // loop_header_branch
      %29 = sbr.rel (%p27) target = $region8
    $region5: #{tpu_custom_call.1} parent=1 // loop_body
      %s31 = ssub.s32 %s26, 1
      %s32 = ssub.s32 %s26, 2
      %s33 = sadd.s32 %s26, 1
      %s34 = ssub.s32 %s26, %s33
      %p35 = scmp.eq.s32.totalorder %s34, 0
      %s37 = sadd.s32 %s36, 1
      %s38 = scalar_select %p35, %s36, %s37
      %p41 = pneg %p35
      %p42 = scmp.eq.s32.totalorder %s26, 1
      %p43 = por %p41, %p42
      %p44 = scmp.ne.s32.totalorder %s36, %s39
      %p45 = scmp.eq.s32.totalorder %s26, 0
      %p46 = por %p44, %p45
      %p47 = scmp.ne.s32.totalorder %s36, %s39
      %p48 = scmp.eq.s32.totalorder %s31, 1
      %p49 = por %p47, %p48
      %p50 = scmp.ne.s32.totalorder %s39, %s40
      %p51 = scmp.eq.s32.totalorder %s31, 0
      %p52 = por %p50, %p51
      %p53 = scmp.ne.s32.totalorder %s39, %s40
      %p54 = scmp.eq.s32.totalorder %s32, 1
      %p55 = por %p53, %p54
      %p57 = scmp.ne.s32.totalorder %s40, %s56
      %p58 = scmp.eq.s32.totalorder %s32, 0
      %p59 = por %p57, %p58
      %s61 = sadd.s32 %s60, 1
      %p64 = scmp.eq.s32.totalorder %s26, 1
      %p65 = scmp.ne.s32.totalorder %s60, %s62
      %p66 = scmp.eq.s32.totalorder %s26, 0
      %p67 = por %p65, %p66
      %p68 = scmp.ne.s32.totalorder %s60, %s62
      %p69 = scmp.eq.s32.totalorder %s31, 1
      %p70 = por %p68, %p69
      %p71 = scmp.ne.s32.totalorder %s62, %s63
      %p72 = scmp.eq.s32.totalorder %s31, 0
      %p73 = por %p71, %p72
      %p74 = scmp.ne.s32.totalorder %s62, %s63
      %p75 = scmp.eq.s32.totalorder %s32, 1
      %p76 = por %p74, %p75
      %p78 = scmp.ne.s32.totalorder %s63, %s77
      %p79 = scmp.eq.s32.totalorder %s32, 0
      %p80 = por %p78, %p79
      %s82 = sadd.s32 %s81, 1
      %p85 = scmp.eq.s32.totalorder %s26, 1
      %p86 = scmp.ne.s32.totalorder %s81, %s83
      %p87 = scmp.eq.s32.totalorder %s26, 0
      %p88 = por %p86, %p87
      %p89 = scmp.ne.s32.totalorder %s81, %s83
      %p90 = scmp.eq.s32.totalorder %s31, 1
      %p91 = por %p89, %p90
      %p92 = scmp.ne.s32.totalorder %s83, %s84
      %p93 = scmp.eq.s32.totalorder %s31, 0
      %p94 = por %p92, %p93
      %p95 = scmp.ne.s32.totalorder %s83, %s84
      %p96 = scmp.eq.s32.totalorder %s32, 1
      %p97 = por %p95, %p96
      %p99 = scmp.ne.s32.totalorder %s84, %s98
      %p100 = scmp.eq.s32.totalorder %s32, 0
      %p101 = por %p99, %p100
      %s103 = sadd.s32 %s102, 1
      %p106 = scmp.eq.s32.totalorder %s26, 1
      %p107 = scmp.ne.s32.totalorder %s102, %s104
      %p108 = scmp.eq.s32.totalorder %s26, 0
      %p109 = por %p107, %p108
      %p110 = scmp.ne.s32.totalorder %s102, %s104
      %p111 = scmp.eq.s32.totalorder %s31, 1
      %p112 = por %p110, %p111
      %p113 = scmp.ne.s32.totalorder %s104, %s105
      %p114 = scmp.eq.s32.totalorder %s31, 0
      %p115 = por %p113, %p114
      %p116 = scmp.ne.s32.totalorder %s104, %s105
      %p117 = scmp.eq.s32.totalorder %s32, 1
      %p118 = por %p116, %p117
      %p120 = scmp.ne.s32.totalorder %s105, %s119
      %p121 = scmp.eq.s32.totalorder %s32, 0
      %p122 = por %p120, %p121
      %s124 = sadd.s32 %s123, 1
      %p127 = scmp.eq.s32.totalorder %s26, 1
      %p128 = scmp.ne.s32.totalorder %s123, %s125
      %p129 = scmp.eq.s32.totalorder %s26, 0
      %p130 = por %p128, %p129
      %p131 = scmp.ne.s32.totalorder %s123, %s125
      %p132 = scmp.eq.s32.totalorder %s31, 1
      %p133 = por %p131, %p132
      %p134 = scmp.ne.s32.totalorder %s125, %s126
      %p135 = scmp.eq.s32.totalorder %s31, 0
      %p136 = por %p134, %p135
      %p137 = scmp.ne.s32.totalorder %s125, %s126
      %p138 = scmp.eq.s32.totalorder %s32, 1
      %p139 = por %p137, %p138
      %p141 = scmp.ne.s32.totalorder %s126, %s140
      %p142 = scmp.eq.s32.totalorder %s32, 0
      %p143 = por %p141, %p142
      %s145 = sadd.s32 %s144, 1
      %p148 = scmp.eq.s32.totalorder %s26, 1
      %p149 = scmp.ne.s32.totalorder %s144, %s146
      %p150 = scmp.eq.s32.totalorder %s26, 0
      %p151 = por %p149, %p150
      %p152 = scmp.ne.s32.totalorder %s144, %s146
      %p153 = scmp.eq.s32.totalorder %s31, 1
      %p154 = por %p152, %p153
      %p155 = scmp.ne.s32.totalorder %s146, %s147
      %p156 = scmp.eq.s32.totalorder %s31, 0
      %p157 = por %p155, %p156
      %p158 = scmp.ne.s32.totalorder %s146, %s147
      %p159 = scmp.eq.s32.totalorder %s32, 1
      %p160 = por %p158, %p159
      %p162 = scmp.ne.s32.totalorder %s147, %s161
      %p163 = scmp.eq.s32.totalorder %s32, 0
      %p164 = por %p162, %p163
      %s165 = ssub.s32 %s26, %s33
      %p166 = scmp.eq.s32.totalorder %s165, 0
      %s168 = sadd.s32 %s167, 1
      %s169 = scalar_select %p166, %s167, %s168
      %p172 = pneg %p166
      %p173 = scmp.eq.s32.totalorder %s26, 1
      %p174 = por %p172, %p173
      %p175 = scmp.ne.s32.totalorder %s167, %s170
      %p176 = scmp.eq.s32.totalorder %s26, 0
      %p177 = por %p175, %p176
      %p178 = scmp.ne.s32.totalorder %s167, %s170
      %p179 = scmp.eq.s32.totalorder %s31, 1
      %p180 = por %p178, %p179
      %p181 = scmp.ne.s32.totalorder %s170, %s171
      %p182 = scmp.eq.s32.totalorder %s31, 0
      %p183 = por %p181, %p182
      %p184 = scmp.ne.s32.totalorder %s170, %s171
      %p185 = scmp.eq.s32.totalorder %s32, 1
      %p186 = por %p184, %p185
      %p188 = scmp.ne.s32.totalorder %s171, %s187
      %p189 = scmp.eq.s32.totalorder %s32, 0
      %p190 = por %p188, %p189
      %s191 = ssub.s32 %s26, %s33
      %p192 = scmp.eq.s32.totalorder %s191, 0
      %s194 = sadd.s32 %s193, 1
      %s195 = scalar_select %p192, %s193, %s194
      %p198 = pneg %p192
      %p199 = scmp.eq.s32.totalorder %s26, 1
      %p200 = por %p198, %p199
      %p201 = scmp.ne.s32.totalorder %s193, %s196
      %p202 = scmp.eq.s32.totalorder %s26, 0
      %p203 = por %p201, %p202
      %p204 = scmp.ne.s32.totalorder %s193, %s196
      %p205 = scmp.eq.s32.totalorder %s31, 1
      %p206 = por %p204, %p205
      %p207 = scmp.ne.s32.totalorder %s196, %s197
      %p208 = scmp.eq.s32.totalorder %s31, 0
      %p209 = por %p207, %p208
      %p210 = scmp.ne.s32.totalorder %s196, %s197
      %p211 = scmp.eq.s32.totalorder %s32, 1
      %p212 = por %p210, %p211
      %p214 = scmp.ne.s32.totalorder %s197, %s213
      %p215 = scmp.eq.s32.totalorder %s32, 0
      %p216 = por %p214, %p215
      %s217 = ssub.s32 %s26, %s33
      %p218 = scmp.eq.s32.totalorder %s217, 0
      %s220 = sadd.s32 %s219, 1
      %s221 = scalar_select %p218, %s219, %s220
      %p224 = pneg %p218
      %p225 = scmp.eq.s32.totalorder %s26, 1
      %p226 = por %p224, %p225
      %p227 = scmp.ne.s32.totalorder %s219, %s222
      %p228 = scmp.eq.s32.totalorder %s26, 0
      %p229 = por %p227, %p228
      %p230 = scmp.ne.s32.totalorder %s219, %s222
      %p231 = scmp.eq.s32.totalorder %s31, 1
      %p232 = por %p230, %p231
      %p233 = scmp.ne.s32.totalorder %s222, %s223
      %p234 = scmp.eq.s32.totalorder %s31, 0
      %p235 = por %p233, %p234
      %p236 = scmp.ne.s32.totalorder %s222, %s223
      %p237 = scmp.eq.s32.totalorder %s32, 1
      %p238 = por %p236, %p237
      %p240 = scmp.ne.s32.totalorder %s223, %s239
      %p241 = scmp.eq.s32.totalorder %s32, 0
      %p242 = por %p240, %p241
      %s243 = ssub.s32 %s26, %s33
      %p244 = scmp.eq.s32.totalorder %s243, 0
      %s246 = sadd.s32 %s245, 1
      %s247 = scalar_select %p244, %s245, %s246
      %p250 = pneg %p244
      %p251 = scmp.eq.s32.totalorder %s26, 1
      %p252 = por %p250, %p251
      %p253 = scmp.ne.s32.totalorder %s245, %s248
      %p254 = scmp.eq.s32.totalorder %s26, 0
      %p255 = por %p253, %p254
      %p256 = scmp.ne.s32.totalorder %s245, %s248
      %p257 = scmp.eq.s32.totalorder %s31, 1
      %p258 = por %p256, %p257
      %p259 = scmp.ne.s32.totalorder %s248, %s249
      %p260 = scmp.eq.s32.totalorder %s31, 0
      %p261 = por %p259, %p260
      %p262 = scmp.ne.s32.totalorder %s248, %s249
      %p263 = scmp.eq.s32.totalorder %s32, 1
      %p264 = por %p262, %p263
      %p266 = scmp.ne.s32.totalorder %s249, %s265
      %p267 = scmp.eq.s32.totalorder %s32, 0
      %p268 = por %p266, %p267
      %s269 = ssub.s32 %s26, %s33
      %p270 = scmp.eq.s32.totalorder %s269, 0
      %s272 = sadd.s32 %s271, 1
      %s273 = scalar_select %p270, %s271, %s272
      %p276 = pneg %p270
      %p277 = scmp.eq.s32.totalorder %s26, 1
      %p278 = por %p276, %p277
      %p279 = scmp.ne.s32.totalorder %s271, %s274
      %p280 = scmp.eq.s32.totalorder %s26, 0
      %p281 = por %p279, %p280
      %p282 = scmp.ne.s32.totalorder %s271, %s274
      %p283 = scmp.eq.s32.totalorder %s31, 1
      %p284 = por %p282, %p283
      %p285 = scmp.ne.s32.totalorder %s274, %s275
      %p286 = scmp.eq.s32.totalorder %s31, 0
      %p287 = por %p285, %p286
      %p288 = scmp.ne.s32.totalorder %s274, %s275
      %p289 = scmp.eq.s32.totalorder %s32, 1
      %p290 = por %p288, %p289
      %p292 = scmp.ne.s32.totalorder %s275, %s291
      %p293 = scmp.eq.s32.totalorder %s32, 0
      %p294 = por %p292, %p293
      %p295 = scmp.le.s32.totalorder 1, %s26
      %p296 = scmp.lt.s32.totalorder %s26, 3
      %p297 = pnand %p295, %p296
      %p298 = pneg %p297
      // Predicated region
      $region9: #{tpu_custom_call.1} parent=5 // pred_check
        _
      $region10: #{tpu_custom_call.1} parent=5 // pred_check_branch
        %300 = sbr.rel (%p297) target = $region12
      $region11: #{tpu_custom_call.1} parent=5 // pred_region
        %s301 = ssub.s32 %s26, 1
        // Predicated region
        $region13: #{tpu_custom_call.1} parent=11 // pred_check
          %p302 = pneg %p73
        $region14: #{tpu_custom_call.1} parent=11 // pred_check_branch
          %304 = sbr.rel (%p302) target = $region16
        $region15: #{tpu_custom_call.1} parent=11 // pred_region
          _
        $region16: #{tpu_custom_call.1} parent=11 // pred_fallthru
          _
        // Predicated region
        $region17: #{tpu_custom_call.1} parent=11 // pred_check
          %p305 = pneg %p94
        $region18: #{tpu_custom_call.1} parent=11 // pred_check_branch
          %307 = sbr.rel (%p305) target = $region20
        $region19: #{tpu_custom_call.1} parent=11 // pred_region
          _
        $region20: #{tpu_custom_call.1} parent=11 // pred_fallthru
          _
        // Predicated region
        $region21: #{tpu_custom_call.1} parent=11 // pred_check
          %p308 = pneg %p115
        $region22: #{tpu_custom_call.1} parent=11 // pred_check_branch
          %310 = sbr.rel (%p308) target = $region24
        $region23: #{tpu_custom_call.1} parent=11 // pred_region
          _
        $region24: #{tpu_custom_call.1} parent=11 // pred_fallthru
          _
        // Predicated region
        $region25: #{tpu_custom_call.1} parent=11 // pred_check
          %p311 = pneg %p136
        $region26: #{tpu_custom_call.1} parent=11 // pred_check_branch
          %313 = sbr.rel (%p311) target = $region28
        $region27: #{tpu_custom_call.1} parent=11 // pred_region
          _
        $region28: #{tpu_custom_call.1} parent=11 // pred_fallthru
          _
        // Predicated region
        $region29: #{tpu_custom_call.1} parent=11 // pred_check
          %p314 = pneg %p157
        $region30: #{tpu_custom_call.1} parent=11 // pred_check_branch
          %316 = sbr.rel (%p314) target = $region32
        $region31: #{tpu_custom_call.1} parent=11 // pred_region
          _
        $region32: #{tpu_custom_call.1} parent=11 // pred_fallthru
          _
      $region12: #{tpu_custom_call.1} parent=5 // pred_fallthru
        _
      %p317 = scmp.lt.s32.totalorder %s26, 2
      // Predicated region
      $region33: #{tpu_custom_call.1} parent=5 // pred_check
        %p318 = pneg %p317
      $region34: #{tpu_custom_call.1} parent=5 // pred_check_branch
        %320 = sbr.rel (%p318) target = $region36
      $region35: #{tpu_custom_call.1} parent=5 // pred_region
        // Predicated region
        $region37: #{tpu_custom_call.1} parent=35 // pred_check
          %p321 = pneg %p46
        $region38: #{tpu_custom_call.1} parent=35 // pred_check_branch
          %323 = sbr.rel (%p321) target = $region40
        $region39: #{tpu_custom_call.1} parent=35 // pred_region
          %s324 = smul.u32 2, %s26
          %p325 = scmp.lt.s32.totalorder %s324, 3
          %s326 = scalar_select %p325, %s324, 3
          %s327 = smul.addr %s326, 8
          %s328 = scalar_lea.vmem %s0, %s327
          %s329 = smul.u32 2, %s26
        $region40: #{tpu_custom_call.1} parent=35 // pred_fallthru
          _
      $region36: #{tpu_custom_call.1} parent=5 // pred_fallthru
        _
      %p330 = scmp.le.s32.totalorder 1, %s26
      %p331 = scmp.lt.s32.totalorder %s26, 3
      %p332 = pnand %p330, %p331
      %p333 = pneg %p332
      // Predicated region
      $region41: #{tpu_custom_call.1} parent=5 // pred_check
        _
      $region42: #{tpu_custom_call.1} parent=5 // pred_check_branch
        %335 = sbr.rel (%p332) target = $region44
      $region43: #{tpu_custom_call.1} parent=5 // pred_region
        %s336 = ssub.s32 %s26, 1
        %s337 = smul.u32 2, %s31
        %p338 = scmp.lt.s32.totalorder %s337, 3
        %s339 = scalar_select %p338, %s337, 3
        %s340 = smul.addr %s339, 8
        %s341 = scalar_lea.vmem %s0, %s340
        %p342 = pneg %p52
        %p343 = pneg %p49
        %p344 = pneg %p73
        %p345 = pneg %p70
        %p346 = pneg %p94
        %p347 = pneg %p91
        %p348 = pneg %p115
        %p349 = pneg %p112
        %p350 = pneg %p136
        %p351 = pneg %p133
        %p352 = pneg %p157
        %p353 = pneg %p154
        %p354 = pneg %p183
        %p355 = pneg %p180
        %s356 = sand.u32 %s170, 1
        %s357 = scalar_lea.sflag [#allocation3], %s356
        %s358 = sand.u32 %s170, 1
        %s359 = smul.addr %s358, 16
        %s360 = scalar_lea.vmem [#allocation2], %s359
        %p361 = pneg %p209
        %p362 = pneg %p206
        %s363 = sand.u32 %s31, 1
        %s364 = scalar_lea.sflag [#allocation5], %s363
        %s365 = sand.u32 %s196, 1
        %s366 = smul.addr %s365, 16
        %s367 = scalar_lea.vmem [#allocation4], %s366
        %p368 = pneg %p235
        %p369 = pneg %p232
        %s370 = sand.u32 %s31, 1
        %s371 = scalar_lea.sflag [#allocation5], %s370
        %s372 = sand.u32 %s222, 1
        %s373 = smul.addr %s372, 16
        %s374 = scalar_lea.vmem [#allocation6], %s373
        %p375 = pneg %p261
        %p376 = pneg %p258
        %s377 = sand.u32 %s31, 1
        %s378 = scalar_lea.sflag [#allocation8], %s377
        %s379 = sand.u32 %s248, 1
        %s380 = smul.addr %s379, 16
        %s381 = scalar_lea.vmem [#allocation7], %s380
        %p382 = pneg %p287
        %p383 = pneg %p284
        %s384 = sand.u32 %s31, 1
        %s385 = scalar_lea.sflag [#allocation8], %s384
        %s386 = sand.u32 %s274, 1
        %s387 = smul.addr %s386, 2
        %s388 = scalar_lea.vmem [#allocation9], %s387
        %s389 = smul.u32 2, %s31
        %p390 = scmp.lt.s32.totalorder %s389, 3
        %s391 = scalar_select %p390, %s389, 3
        %s392 = smul.addr %s391, 8
        %s393 = scalar_lea.vmem %s0, %s392
        %s394 = smul.u32 2, %s31
        %s395 = smul.u32 2, %s31
        %s396 = smul.u32 2, %s31
        %s397 = smul.u32 2, %s31
        %s398 = smul.u32 2, %s31
        %s399 = smul.u32 2, %s31
        %v400 = vld [vmem:[%s393] sm:$0xff]
        %v401 = vld [vmem:[%s393 + $0x8] sm:$0xff]
        %v402 = vld [vmem:[%s5] sm:$0xff]
        %vm403 = vcmask 64512
        %v405 = vsel %vm403, %v402, 0
        %407 = vmatpush.msra.mxu0 0.0
        %408 = vmatpush.msra.mxu0 0.0
        %409 = vmatpush.msra.mxu0 0.0
        %410 = vmatpush.msra.mxu0 0.0
        %411 = vmatpush.msra.mxu0 0.0
        %412 = vmatpush.msra.mxu0 0.0
        %413 = vmatpush.msra.mxu0 0.0
        %414 = vmatpush.msra.mxu0 0.0
        %415 = vmatpush.msra.mxu0 0.0
        %416 = vmatpush.msra.mxu0 0.0
        %417 = vmatpush.msra.mxu0 0.0
        %418 = vmatpush.msra.mxu0 0.0
        %419 = vmatpush.msra.mxu0 0.0
        %420 = vmatpush.msra.mxu0 0.0
        %421 = vmatpush.msra.mxu0 0.0
        %422 = vmatpush.msra.mxu0 %v400
        %423 = vmatmul.f32.gmra.mxu0 %v405
        %v424 = vpop.f32.mrf.mxu0
        %v425 = vadd.f32 0.0, %v424
        %426 = vdwg.mxu0
        %427 = vmatpush.msra.mxu0 0.0
        %428 = vmatpush.msra.mxu0 0.0
        %429 = vmatpush.msra.mxu0 0.0
        %430 = vmatpush.msra.mxu0 0.0
        %431 = vmatpush.msra.mxu0 0.0
        %432 = vmatpush.msra.mxu0 0.0
        %433 = vmatpush.msra.mxu0 0.0
        %434 = vmatpush.msra.mxu0 0.0
        %435 = vmatpush.msra.mxu0 0.0
        %436 = vmatpush.msra.mxu0 0.0
        %437 = vmatpush.msra.mxu0 0.0
        %438 = vmatpush.msra.mxu0 0.0
        %439 = vmatpush.msra.mxu0 0.0
        %440 = vmatpush.msra.mxu0 0.0
        %441 = vmatpush.msra.mxu0 0.0
        %442 = vmatpush.msra.mxu0 %v401
        %443 = vmatmul.f32.gmra.mxu0 %v405
        %v444 = vpop.f32.mrf.mxu0
        %v445 = vadd.f32 0.0, %v444
        %446 = vdwg.mxu0
        %v447 = vld [vmem:[%s1] sm:$0xff]
        %v448 = vld [vmem:[%s1 + $0x8] sm:$0xff]
        %v449 = vld [vmem:[%s1 + $0x10] sm:$0xff]
        %v450 = vld [vmem:[%s1 + $0x18] sm:$0xff]
        %v451 = vld [vmem:[%s1 + $0x20] sm:$0xff]
        %v452 = vld [vmem:[%s1 + $0x28] sm:$0xff]
        %v453 = vld [vmem:[%s1 + $0x30] sm:$0xff]
        %v454 = vld [vmem:[%s1 + $0x38] sm:$0xff]
        %v455 = vld [vmem:[%s2] sm:$0xff]
        %v456 = vld [vmem:[%s2 + $0x8] sm:$0xff]
        %v457 = vld [vmem:[%s2 + $0x10] sm:$0xff]
        %v458 = vld [vmem:[%s2 + $0x18] sm:$0xff]
        %v459 = vld [vmem:[%s2 + $0x20] sm:$0xff]
        %v460 = vld [vmem:[%s2 + $0x28] sm:$0xff]
        %v461 = vld [vmem:[%s2 + $0x30] sm:$0xff]
        %v462 = vld [vmem:[%s2 + $0x38] sm:$0xff]
        %464 = vset.pattern.permute.xlu0 0
        %465 = vperm.xlu0 %464, %v455
        %v466 = vpop.permute.xlu0 %465
        %469 = vset.pattern.permute.xlu0 0
        %470 = vperm.xlu0 %469, %v456
        %v471 = vpop.permute.xlu0 %470
        %474 = vset.pattern.permute.xlu0 0
        %475 = vperm.xlu0 %474, %v457
        %v476 = vpop.permute.xlu0 %475
        %479 = vset.pattern.permute.xlu0 0
        %480 = vperm.xlu0 %479, %v458
        %v481 = vpop.permute.xlu0 %480
        %484 = vset.pattern.permute.xlu0 0
        %485 = vperm.xlu0 %484, %v459
        %v486 = vpop.permute.xlu0 %485
        %489 = vset.pattern.permute.xlu0 0
        %490 = vperm.xlu0 %489, %v460
        %v491 = vpop.permute.xlu0 %490
        %494 = vset.pattern.permute.xlu0 0
        %495 = vperm.xlu0 %494, %v461
        %v496 = vpop.permute.xlu0 %495
        %499 = vset.pattern.permute.xlu0 0
        %500 = vperm.xlu0 %499, %v462
        %v501 = vpop.permute.xlu0 %500
        %v504 = vsel %vm403, %v447, 0
        %v507 = vsel %vm403, %v448, 0
        %v510 = vsel %vm403, %v449, 0
        %v513 = vsel %vm403, %v450, 0
        %v516 = vsel %vm403, %v451, 0
        %v519 = vsel %vm403, %v452, 0
        %v522 = vsel %vm403, %v453, 0
        %v525 = vsel %vm403, %v454, 0
        %527 = vmatpush.msra.mxu0 0.0
        %528 = vmatpush.msra.mxu0 0.0
        %529 = vmatpush.msra.mxu0 0.0
        %530 = vmatpush.msra.mxu0 0.0
        %531 = vmatpush.msra.mxu0 0.0
        %532 = vmatpush.msra.mxu0 0.0
        %533 = vmatpush.msra.mxu0 0.0
        %534 = vmatpush.msra.mxu0 0.0
        %535 = vmatpush.msra.mxu0 0.0
        %536 = vmatpush.msra.mxu0 0.0
        %537 = vmatpush.msra.mxu0 0.0
        %538 = vmatpush.msra.mxu0 0.0
        %539 = vmatpush.msra.mxu0 0.0
        %540 = vmatpush.msra.mxu0 0.0
        %541 = vmatpush.msra.mxu0 0.0
        %542 = vmatpush.msra.mxu0 %v400
        %543 = vmatmul.f32.gmra.mxu0 %v504
        %v544 = vpop.f32.mrf.mxu0
        %v545 = vadd.f32 %v466, %v544
        %546 = vmatmul.f32.gmra.mxu0 %v507
        %v547 = vpop.f32.mrf.mxu0
        %v548 = vadd.f32 %v471, %v547
        %549 = vmatmul.f32.gmra.mxu0 %v510
        %v550 = vpop.f32.mrf.mxu0
        %v551 = vadd.f32 %v476, %v550
        %552 = vmatmul.f32.gmra.mxu0 %v513
        %v553 = vpop.f32.mrf.mxu0
        %v554 = vadd.f32 %v481, %v553
        %555 = vmatmul.f32.gmra.mxu0 %v516
        %v556 = vpop.f32.mrf.mxu0
        %v557 = vadd.f32 %v486, %v556
        %558 = vmatmul.f32.gmra.mxu0 %v519
        %v559 = vpop.f32.mrf.mxu0
        %v560 = vadd.f32 %v491, %v559
        %561 = vmatmul.f32.gmra.mxu0 %v522
        %v562 = vpop.f32.mrf.mxu0
        %v563 = vadd.f32 %v496, %v562
        %564 = vmatmul.f32.gmra.mxu0 %v525
        %v565 = vpop.f32.mrf.mxu0
        %v566 = vadd.f32 %v501, %v565
        %567 = vdwg.mxu0
        %568 = vmatpush.msra.mxu0 0.0
        %569 = vmatpush.msra.mxu0 0.0
        %570 = vmatpush.msra.mxu0 0.0
        %571 = vmatpush.msra.mxu0 0.0
        %572 = vmatpush.msra.mxu0 0.0
        %573 = vmatpush.msra.mxu0 0.0
        %574 = vmatpush.msra.mxu0 0.0
        %575 = vmatpush.msra.mxu0 0.0
        %576 = vmatpush.msra.mxu0 0.0
        %577 = vmatpush.msra.mxu0 0.0
        %578 = vmatpush.msra.mxu0 0.0
        %579 = vmatpush.msra.mxu0 0.0
        %580 = vmatpush.msra.mxu0 0.0
        %581 = vmatpush.msra.mxu0 0.0
        %582 = vmatpush.msra.mxu0 0.0
        %583 = vmatpush.msra.mxu0 %v401
        %584 = vmatmul.f32.gmra.mxu0 %v504
        %v585 = vpop.f32.mrf.mxu0
        %v586 = vadd.f32 %v466, %v585
        %587 = vmatmul.f32.gmra.mxu0 %v507
        %v588 = vpop.f32.mrf.mxu0
        %v589 = vadd.f32 %v471, %v588
        %590 = vmatmul.f32.gmra.mxu0 %v510
        %v591 = vpop.f32.mrf.mxu0
        %v592 = vadd.f32 %v476, %v591
        %593 = vmatmul.f32.gmra.mxu0 %v513
        %v594 = vpop.f32.mrf.mxu0
        %v595 = vadd.f32 %v481, %v594
        %596 = vmatmul.f32.gmra.mxu0 %v516
        %v597 = vpop.f32.mrf.mxu0
        %v598 = vadd.f32 %v486, %v597
        %599 = vmatmul.f32.gmra.mxu0 %v519
        %v600 = vpop.f32.mrf.mxu0
        %v601 = vadd.f32 %v491, %v600
        %602 = vmatmul.f32.gmra.mxu0 %v522
        %v603 = vpop.f32.mrf.mxu0
        %v604 = vadd.f32 %v496, %v603
        %605 = vmatmul.f32.gmra.mxu0 %v525
        %v606 = vpop.f32.mrf.mxu0
        %v607 = vadd.f32 %v501, %v606
        %608 = vdwg.mxu0
        %vm609 = vcmp.ge.f32.partialorder %v545, 0.0
        %vm610 = vcmp.ge.f32.partialorder %v586, 0.0
        %vm611 = vcmp.ge.f32.partialorder %v548, 0.0
        %vm612 = vcmp.ge.f32.partialorder %v589, 0.0
        %vm613 = vcmp.ge.f32.partialorder %v551, 0.0
        %vm614 = vcmp.ge.f32.partialorder %v592, 0.0
        %vm615 = vcmp.ge.f32.partialorder %v554, 0.0
        %vm616 = vcmp.ge.f32.partialorder %v595, 0.0
        %vm617 = vcmp.ge.f32.partialorder %v557, 0.0
        %vm618 = vcmp.ge.f32.partialorder %v598, 0.0
        %vm619 = vcmp.ge.f32.partialorder %v560, 0.0
        %vm620 = vcmp.ge.f32.partialorder %v601, 0.0
        %vm621 = vcmp.ge.f32.partialorder %v563, 0.0
        %vm622 = vcmp.ge.f32.partialorder %v604, 0.0
        %vm623 = vcmp.ge.f32.partialorder %v566, 0.0
        %vm624 = vcmp.ge.f32.partialorder %v607, 0.0
        %v625 = vmul.f32 %v545, 0.2
        %v626 = vmul.f32 %v586, 0.2
        %v627 = vmul.f32 %v548, 0.2
        %v628 = vmul.f32 %v589, 0.2
        %v629 = vmul.f32 %v551, 0.2
        %v630 = vmul.f32 %v592, 0.2
        %v631 = vmul.f32 %v554, 0.2
        %v632 = vmul.f32 %v595, 0.2
        %v633 = vmul.f32 %v557, 0.2
        %v634 = vmul.f32 %v598, 0.2
        %v635 = vmul.f32 %v560, 0.2
        %v636 = vmul.f32 %v601, 0.2
        %v637 = vmul.f32 %v563, 0.2
        %v638 = vmul.f32 %v604, 0.2
        %v639 = vmul.f32 %v566, 0.2
        %v640 = vmul.f32 %v607, 0.2
        %v641 = vsel %vm609, %v545, %v625
        %v642 = vsel %vm610, %v586, %v626
        %v643 = vsel %vm611, %v548, %v627
        %v644 = vsel %vm612, %v589, %v628
        %v645 = vsel %vm613, %v551, %v629
        %v646 = vsel %vm614, %v592, %v630
        %v647 = vsel %vm615, %v554, %v631
        %v648 = vsel %vm616, %v595, %v632
        %v649 = vsel %vm617, %v557, %v633
        %v650 = vsel %vm618, %v598, %v634
        %v651 = vsel %vm619, %v560, %v635
        %v652 = vsel %vm620, %v601, %v636
        %v653 = vsel %vm621, %v563, %v637
        %v654 = vsel %vm622, %v604, %v638
        %v655 = vsel %vm623, %v566, %v639
        %v656 = vsel %vm624, %v607, %v640
        %v657 = vld [vmem:[%s3] sm:$0xff]
        %v658 = vld [vmem:[%s3 + $0x8] sm:$0xff]
        %v659 = vld [vmem:[%s4] sm:$0xff]
        %v660 = vld [vmem:[%s4 + $0x8] sm:$0xff]
        %662 = vset.pattern.permute.xlu0 0
        %663 = vperm.xlu0 %662, %v659
        %v664 = vpop.permute.xlu0 %663
        %667 = vset.pattern.permute.xlu0 0
        %668 = vperm.xlu0 %667, %v660
        %v669 = vpop.permute.xlu0 %668
        %vm671 = vcmask 523264
        %v673 = vsel %vm671, %v657, 0
        %v676 = vsel %vm671, %v658, 0
        %678 = vmatpush.msra.mxu0 0.0
        %679 = vmatpush.msra.mxu0 0.0
        %680 = vmatpush.msra.mxu0 0.0
        %681 = vmatpush.msra.mxu0 0.0
        %682 = vmatpush.msra.mxu0 0.0
        %683 = vmatpush.msra.mxu0 0.0
        %684 = vmatpush.msra.mxu0 0.0
        %685 = vmatpush.msra.mxu0 0.0
        %686 = vmatpush.msra.mxu0 %v655
        %687 = vmatpush.msra.mxu0 %v653
        %688 = vmatpush.msra.mxu0 %v651
        %689 = vmatpush.msra.mxu0 %v649
        %690 = vmatpush.msra.mxu0 %v647
        %691 = vmatpush.msra.mxu0 %v645
        %692 = vmatpush.msra.mxu0 %v643
        %693 = vmatpush.msra.mxu0 %v641
        %694 = vmatmul.f32.gmra.mxu0 %v673
        %v695 = vpop.f32.mrf.mxu0
        %v696 = vadd.f32 %v664, %v695
        %697 = vmatmul.f32.gmra.mxu0 %v676
        %v698 = vpop.f32.mrf.mxu0
        %v699 = vadd.f32 %v669, %v698
        %700 = vdwg.mxu0
        %701 = vmatpush.msra.mxu0 0.0
        %702 = vmatpush.msra.mxu0 0.0
        %703 = vmatpush.msra.mxu0 0.0
        %704 = vmatpush.msra.mxu0 0.0
        %705 = vmatpush.msra.mxu0 0.0
        %706 = vmatpush.msra.mxu0 0.0
        %707 = vmatpush.msra.mxu0 0.0
        %708 = vmatpush.msra.mxu0 0.0
        %709 = vmatpush.msra.mxu0 %v656
        %710 = vmatpush.msra.mxu0 %v654
        %711 = vmatpush.msra.mxu0 %v652
        %712 = vmatpush.msra.mxu0 %v650
        %713 = vmatpush.msra.mxu0 %v648
        %714 = vmatpush.msra.mxu0 %v646
        %715 = vmatpush.msra.mxu0 %v644
        %716 = vmatpush.msra.mxu0 %v642
        %717 = vmatmul.f32.gmra.mxu0 %v673
        %v718 = vpop.f32.mrf.mxu0
        %v719 = vadd.f32 %v664, %v718
        %720 = vmatmul.f32.gmra.mxu0 %v676
        %v721 = vpop.f32.mrf.mxu0
        %v722 = vadd.f32 %v669, %v721
        %723 = vdwg.mxu0
        %v724 = vmul.f32 %v696, 1.442695
        %v725 = vpow.pop %v724
        %v726 = vmul.f32 %v719, 1.442695
        %v727 = vpow.pop %v726
        %v728 = vmul.f32 %v725, %v425
        %v729 = vmul.f32 %v727, %v445
        %v730 = vadd.f32 %v728, %v699
        %v731 = vadd.f32 %v729, %v722
        %v732 = vrot.slane %v696, 4
        %v733 = vadd.f32 %v696, %v732
        %v734 = vrot.slane %v733, 2
        %v735 = vadd.f32 %v733, %v734
        %v736 = vrot.slane %v735, 1
        %v737 = vadd.f32 %v735, %v736
        %v738 = vrot.slane %v719, 4
        %v739 = vadd.f32 %v719, %v738
        %v740 = vrot.slane %v739, 2
        %v741 = vadd.f32 %v739, %v740
        %v742 = vrot.slane %v741, 1
        %v743 = vadd.f32 %v741, %v742
        %v744 = vadd.f32 %v737, 0.0
        %v745 = vadd.f32 %v743, 0.0
        %746 = vst [vmem:[%s360] sm:$0xff] %v730
        %747 = vst [vmem:[%s360 + $0x8] sm:$0xff] %v731
        %748 = vmatpush.msra.mxu0 0.0
        %749 = vmatpush.msra.mxu0 0.0
        %750 = vmatpush.msra.mxu0 0.0
        %751 = vmatpush.msra.mxu0 0.0
        %752 = vmatpush.msra.mxu0 0.0
        %753 = vmatpush.msra.mxu0 0.0
        %754 = vmatpush.msra.mxu0 0.0
        %755 = vmatpush.msra.mxu0 0.0
        %756 = vmatpush.msra.mxu0 0.0
        %757 = vmatpush.msra.mxu0 0.0
        %758 = vmatpush.msra.mxu0 0.0
        %759 = vmatpush.msra.mxu0 0.0
        %760 = vmatpush.msra.mxu0 0.0
        %761 = vmatpush.msra.mxu0 0.0
        %762 = vmatpush.msra.mxu0 0.0
        %763 = vmatpush.msra.mxu0 %v730
        %764 = vmatmul.f32.gmra.mxu0 %v405
        %v765 = vpop.f32.mrf.mxu0
        %v766 = vadd.f32 0.0, %v765
        %767 = vdwg.mxu0
        %768 = vmatpush.msra.mxu0 0.0
        %769 = vmatpush.msra.mxu0 0.0
        %770 = vmatpush.msra.mxu0 0.0
        %771 = vmatpush.msra.mxu0 0.0
        %772 = vmatpush.msra.mxu0 0.0
        %773 = vmatpush.msra.mxu0 0.0
        %774 = vmatpush.msra.mxu0 0.0
        %775 = vmatpush.msra.mxu0 0.0
        %776 = vmatpush.msra.mxu0 0.0
        %777 = vmatpush.msra.mxu0 0.0
        %778 = vmatpush.msra.mxu0 0.0
        %779 = vmatpush.msra.mxu0 0.0
        %780 = vmatpush.msra.mxu0 0.0
        %781 = vmatpush.msra.mxu0 0.0
        %782 = vmatpush.msra.mxu0 0.0
        %783 = vmatpush.msra.mxu0 %v731
        %784 = vmatmul.f32.gmra.mxu0 %v405
        %v785 = vpop.f32.mrf.mxu0
        %v786 = vadd.f32 0.0, %v785
        %787 = vdwg.mxu0
        %s788 = scalar_lea.vmem %s1, 64
        %v789 = vld [vmem:[%s788] sm:$0xff]
        %v790 = vld [vmem:[%s788 + $0x8] sm:$0xff]
        %v791 = vld [vmem:[%s788 + $0x10] sm:$0xff]
        %v792 = vld [vmem:[%s788 + $0x18] sm:$0xff]
        %v793 = vld [vmem:[%s788 + $0x20] sm:$0xff]
        %v794 = vld [vmem:[%s788 + $0x28] sm:$0xff]
        %v795 = vld [vmem:[%s788 + $0x30] sm:$0xff]
        %v796 = vld [vmem:[%s788 + $0x38] sm:$0xff]
        %s797 = scalar_lea.vmem %s2, 64
        %v798 = vld [vmem:[%s797] sm:$0xff]
        %v799 = vld [vmem:[%s797 + $0x8] sm:$0xff]
        %v800 = vld [vmem:[%s797 + $0x10] sm:$0xff]
        %v801 = vld [vmem:[%s797 + $0x18] sm:$0xff]
        %v802 = vld [vmem:[%s797 + $0x20] sm:$0xff]
        %v803 = vld [vmem:[%s797 + $0x28] sm:$0xff]
        %v804 = vld [vmem:[%s797 + $0x30] sm:$0xff]
        %v805 = vld [vmem:[%s797 + $0x38] sm:$0xff]
        %807 = vset.pattern.permute.xlu0 0
        %808 = vperm.xlu0 %807, %v798
        %v809 = vpop.permute.xlu0 %808
        %812 = vset.pattern.permute.xlu0 0
        %813 = vperm.xlu0 %812, %v799
        %v814 = vpop.permute.xlu0 %813
        %817 = vset.pattern.permute.xlu0 0
        %818 = vperm.xlu0 %817, %v800
        %v819 = vpop.permute.xlu0 %818
        %822 = vset.pattern.permute.xlu0 0
        %823 = vperm.xlu0 %822, %v801
        %v824 = vpop.permute.xlu0 %823
        %827 = vset.pattern.permute.xlu0 0
        %828 = vperm.xlu0 %827, %v802
        %v829 = vpop.permute.xlu0 %828
        %832 = vset.pattern.permute.xlu0 0
        %833 = vperm.xlu0 %832, %v803
        %v834 = vpop.permute.xlu0 %833
        %837 = vset.pattern.permute.xlu0 0
        %838 = vperm.xlu0 %837, %v804
        %v839 = vpop.permute.xlu0 %838
        %842 = vset.pattern.permute.xlu0 0
        %843 = vperm.xlu0 %842, %v805
        %v844 = vpop.permute.xlu0 %843
        %v847 = vsel %vm403, %v789, 0
        %v850 = vsel %vm403, %v790, 0
        %v853 = vsel %vm403, %v791, 0
        %v856 = vsel %vm403, %v792, 0
        %v859 = vsel %vm403, %v793, 0
        %v862 = vsel %vm403, %v794, 0
        %v865 = vsel %vm403, %v795, 0
        %v868 = vsel %vm403, %v796, 0
        %870 = vmatpush.msra.mxu0 0.0
        %871 = vmatpush.msra.mxu0 0.0
        %872 = vmatpush.msra.mxu0 0.0
        %873 = vmatpush.msra.mxu0 0.0
        %874 = vmatpush.msra.mxu0 0.0
        %875 = vmatpush.msra.mxu0 0.0
        %876 = vmatpush.msra.mxu0 0.0
        %877 = vmatpush.msra.mxu0 0.0
        %878 = vmatpush.msra.mxu0 0.0
        %879 = vmatpush.msra.mxu0 0.0
        %880 = vmatpush.msra.mxu0 0.0
        %881 = vmatpush.msra.mxu0 0.0
        %882 = vmatpush.msra.mxu0 0.0
        %883 = vmatpush.msra.mxu0 0.0
        %884 = vmatpush.msra.mxu0 0.0
        %885 = vmatpush.msra.mxu0 %v730
        %886 = vmatmul.f32.gmra.mxu0 %v847
        %v887 = vpop.f32.mrf.mxu0
        %v888 = vadd.f32 %v809, %v887
        %889 = vmatmul.f32.gmra.mxu0 %v850
        %v890 = vpop.f32.mrf.mxu0
        %v891 = vadd.f32 %v814, %v890
        %892 = vmatmul.f32.gmra.mxu0 %v853
        %v893 = vpop.f32.mrf.mxu0
        %v894 = vadd.f32 %v819, %v893
        %895 = vmatmul.f32.gmra.mxu0 %v856
        %v896 = vpop.f32.mrf.mxu0
        %v897 = vadd.f32 %v824, %v896
        %898 = vmatmul.f32.gmra.mxu0 %v859
        %v899 = vpop.f32.mrf.mxu0
        %v900 = vadd.f32 %v829, %v899
        %901 = vmatmul.f32.gmra.mxu0 %v862
        %v902 = vpop.f32.mrf.mxu0
        %v903 = vadd.f32 %v834, %v902
        %904 = vmatmul.f32.gmra.mxu0 %v865
        %v905 = vpop.f32.mrf.mxu0
        %v906 = vadd.f32 %v839, %v905
        %907 = vmatmul.f32.gmra.mxu0 %v868
        %v908 = vpop.f32.mrf.mxu0
        %v909 = vadd.f32 %v844, %v908
        %910 = vdwg.mxu0
        %911 = vmatpush.msra.mxu0 0.0
        %912 = vmatpush.msra.mxu0 0.0
        %913 = vmatpush.msra.mxu0 0.0
        %914 = vmatpush.msra.mxu0 0.0
        %915 = vmatpush.msra.mxu0 0.0
        %916 = vmatpush.msra.mxu0 0.0
        %917 = vmatpush.msra.mxu0 0.0
        %918 = vmatpush.msra.mxu0 0.0
        %919 = vmatpush.msra.mxu0 0.0
        %920 = vmatpush.msra.mxu0 0.0
        %921 = vmatpush.msra.mxu0 0.0
        %922 = vmatpush.msra.mxu0 0.0
        %923 = vmatpush.msra.mxu0 0.0
        %924 = vmatpush.msra.mxu0 0.0
        %925 = vmatpush.msra.mxu0 0.0
        %926 = vmatpush.msra.mxu0 %v731
        %927 = vmatmul.f32.gmra.mxu0 %v847
        %v928 = vpop.f32.mrf.mxu0
        %v929 = vadd.f32 %v809, %v928
        %930 = vmatmul.f32.gmra.mxu0 %v850
        %v931 = vpop.f32.mrf.mxu0
        %v932 = vadd.f32 %v814, %v931
        %933 = vmatmul.f32.gmra.mxu0 %v853
        %v934 = vpop.f32.mrf.mxu0
        %v935 = vadd.f32 %v819, %v934
        %936 = vmatmul.f32.gmra.mxu0 %v856
        %v937 = vpop.f32.mrf.mxu0
        %v938 = vadd.f32 %v824, %v937
        %939 = vmatmul.f32.gmra.mxu0 %v859
        %v940 = vpop.f32.mrf.mxu0
        %v941 = vadd.f32 %v829, %v940
        %942 = vmatmul.f32.gmra.mxu0 %v862
        %v943 = vpop.f32.mrf.mxu0
        %v944 = vadd.f32 %v834, %v943
        %945 = vmatmul.f32.gmra.mxu0 %v865
        %v946 = vpop.f32.mrf.mxu0
        %v947 = vadd.f32 %v839, %v946
        %948 = vmatmul.f32.gmra.mxu0 %v868
        %v949 = vpop.f32.mrf.mxu0
        %v950 = vadd.f32 %v844, %v949
        %951 = vdwg.mxu0
        %vm952 = vcmp.ge.f32.partialorder %v888, 0.0
        %vm953 = vcmp.ge.f32.partialorder %v929, 0.0
        %vm954 = vcmp.ge.f32.partialorder %v891, 0.0
        %vm955 = vcmp.ge.f32.partialorder %v932, 0.0
        %vm956 = vcmp.ge.f32.partialorder %v894, 0.0
        %vm957 = vcmp.ge.f32.partialorder %v935, 0.0
        %vm958 = vcmp.ge.f32.partialorder %v897, 0.0
        %vm959 = vcmp.ge.f32.partialorder %v938, 0.0
        %vm960 = vcmp.ge.f32.partialorder %v900, 0.0
        %vm961 = vcmp.ge.f32.partialorder %v941, 0.0
        %vm962 = vcmp.ge.f32.partialorder %v903, 0.0
        %vm963 = vcmp.ge.f32.partialorder %v944, 0.0
        %vm964 = vcmp.ge.f32.partialorder %v906, 0.0
        %vm965 = vcmp.ge.f32.partialorder %v947, 0.0
        %vm966 = vcmp.ge.f32.partialorder %v909, 0.0
        %vm967 = vcmp.ge.f32.partialorder %v950, 0.0
        %v968 = vmul.f32 %v888, 0.2
        %v969 = vmul.f32 %v929, 0.2
        %v970 = vmul.f32 %v891, 0.2
        %v971 = vmul.f32 %v932, 0.2
        %v972 = vmul.f32 %v894, 0.2
        %v973 = vmul.f32 %v935, 0.2
        %v974 = vmul.f32 %v897, 0.2
        %v975 = vmul.f32 %v938, 0.2
        %v976 = vmul.f32 %v900, 0.2
        %v977 = vmul.f32 %v941, 0.2
        %v978 = vmul.f32 %v903, 0.2
        %v979 = vmul.f32 %v944, 0.2
        %v980 = vmul.f32 %v906, 0.2
        %v981 = vmul.f32 %v947, 0.2
        %v982 = vmul.f32 %v909, 0.2
        %v983 = vmul.f32 %v950, 0.2
        %v984 = vsel %vm952, %v888, %v968
        %v985 = vsel %vm953, %v929, %v969
        %v986 = vsel %vm954, %v891, %v970
        %v987 = vsel %vm955, %v932, %v971
        %v988 = vsel %vm956, %v894, %v972
        %v989 = vsel %vm957, %v935, %v973
        %v990 = vsel %vm958, %v897, %v974
        %v991 = vsel %vm959, %v938, %v975
        %v992 = vsel %vm960, %v900, %v976
        %v993 = vsel %vm961, %v941, %v977
        %v994 = vsel %vm962, %v903, %v978
        %v995 = vsel %vm963, %v944, %v979
        %v996 = vsel %vm964, %v906, %v980
        %v997 = vsel %vm965, %v947, %v981
        %v998 = vsel %vm966, %v909, %v982
        %v999 = vsel %vm967, %v950, %v983
        %s1000 = scalar_lea.vmem %s3, 16
        %v1001 = vld [vmem:[%s1000] sm:$0xff]
        %v1002 = vld [vmem:[%s1000 + $0x8] sm:$0xff]
        %s1003 = scalar_lea.vmem %s4, 16
        %v1004 = vld [vmem:[%s1003] sm:$0xff]
        %v1005 = vld [vmem:[%s1003 + $0x8] sm:$0xff]
        %1007 = vset.pattern.permute.xlu0 0
        %1008 = vperm.xlu0 %1007, %v1004
        %v1009 = vpop.permute.xlu0 %1008
        %1012 = vset.pattern.permute.xlu0 0
        %1013 = vperm.xlu0 %1012, %v1005
        %v1014 = vpop.permute.xlu0 %1013
        %v1017 = vsel %vm671, %v1001, 0
        %v1020 = vsel %vm671, %v1002, 0
        %1022 = vmatpush.msra.mxu0 0.0
        %1023 = vmatpush.msra.mxu0 0.0
        %1024 = vmatpush.msra.mxu0 0.0
        %1025 = vmatpush.msra.mxu0 0.0
        %1026 = vmatpush.msra.mxu0 0.0
        %1027 = vmatpush.msra.mxu0 0.0
        %1028 = vmatpush.msra.mxu0 0.0
        %1029 = vmatpush.msra.mxu0 0.0
        %1030 = vmatpush.msra.mxu0 %v998
        %1031 = vmatpush.msra.mxu0 %v996
        %1032 = vmatpush.msra.mxu0 %v994
        %1033 = vmatpush.msra.mxu0 %v992
        %1034 = vmatpush.msra.mxu0 %v990
        %1035 = vmatpush.msra.mxu0 %v988
        %1036 = vmatpush.msra.mxu0 %v986
        %1037 = vmatpush.msra.mxu0 %v984
        %1038 = vmatmul.f32.gmra.mxu0 %v1017
        %v1039 = vpop.f32.mrf.mxu0
        %v1040 = vadd.f32 %v1009, %v1039
        %1041 = vmatmul.f32.gmra.mxu0 %v1020
        %v1042 = vpop.f32.mrf.mxu0
        %v1043 = vadd.f32 %v1014, %v1042
        %1044 = vdwg.mxu0
        %1045 = vmatpush.msra.mxu0 0.0
        %1046 = vmatpush.msra.mxu0 0.0
        %1047 = vmatpush.msra.mxu0 0.0
        %1048 = vmatpush.msra.mxu0 0.0
        %1049 = vmatpush.msra.mxu0 0.0
        %1050 = vmatpush.msra.mxu0 0.0
        %1051 = vmatpush.msra.mxu0 0.0
        %1052 = vmatpush.msra.mxu0 0.0
        %1053 = vmatpush.msra.mxu0 %v999
        %1054 = vmatpush.msra.mxu0 %v997
        %1055 = vmatpush.msra.mxu0 %v995
        %1056 = vmatpush.msra.mxu0 %v993
        %1057 = vmatpush.msra.mxu0 %v991
        %1058 = vmatpush.msra.mxu0 %v989
        %1059 = vmatpush.msra.mxu0 %v987
        %1060 = vmatpush.msra.mxu0 %v985
        %1061 = vmatmul.f32.gmra.mxu0 %v1017
        %v1062 = vpop.f32.mrf.mxu0
        %v1063 = vadd.f32 %v1009, %v1062
        %1064 = vmatmul.f32.gmra.mxu0 %v1020
        %v1065 = vpop.f32.mrf.mxu0
        %v1066 = vadd.f32 %v1014, %v1065
        %1067 = vdwg.mxu0
        %v1068 = vmul.f32 %v1040, 1.442695
        %v1069 = vpow.pop %v1068
        %v1070 = vmul.f32 %v1063, 1.442695
        %v1071 = vpow.pop %v1070
        %v1072 = vmul.f32 %v1069, %v766
        %v1073 = vmul.f32 %v1071, %v786
        %v1074 = vadd.f32 %v1072, %v1043
        %v1075 = vadd.f32 %v1073, %v1066
        %v1076 = vrot.slane %v1040, 4
        %v1077 = vadd.f32 %v1040, %v1076
        %v1078 = vrot.slane %v1077, 2
        %v1079 = vadd.f32 %v1077, %v1078
        %v1080 = vrot.slane %v1079, 1
        %v1081 = vadd.f32 %v1079, %v1080
        %v1082 = vrot.slane %v1063, 4
        %v1083 = vadd.f32 %v1063, %v1082
        %v1084 = vrot.slane %v1083, 2
        %v1085 = vadd.f32 %v1083, %v1084
        %v1086 = vrot.slane %v1085, 1
        %v1087 = vadd.f32 %v1085, %v1086
        %v1088 = vadd.f32 %v744, %v1081
        %v1089 = vadd.f32 %v745, %v1087
        %1090 = vst [vmem:[%s367] sm:$0xff] %v1074
        %1091 = vst [vmem:[%s367 + $0x8] sm:$0xff] %v1075
        %1092 = vmatpush.msra.mxu0 0.0
        %1093 = vmatpush.msra.mxu0 0.0
        %1094 = vmatpush.msra.mxu0 0.0
        %1095 = vmatpush.msra.mxu0 0.0
        %1096 = vmatpush.msra.mxu0 0.0
        %1097 = vmatpush.msra.mxu0 0.0
        %1098 = vmatpush.msra.mxu0 0.0
        %1099 = vmatpush.msra.mxu0 0.0
        %1100 = vmatpush.msra.mxu0 0.0
        %1101 = vmatpush.msra.mxu0 0.0
        %1102 = vmatpush.msra.mxu0 0.0
        %1103 = vmatpush.msra.mxu0 0.0
        %1104 = vmatpush.msra.mxu0 0.0
        %1105 = vmatpush.msra.mxu0 0.0
        %1106 = vmatpush.msra.mxu0 0.0
        %1107 = vmatpush.msra.mxu0 %v1074
        %1108 = vmatmul.f32.gmra.mxu0 %v405
        %v1109 = vpop.f32.mrf.mxu0
        %v1110 = vadd.f32 0.0, %v1109
        %1111 = vdwg.mxu0
        %1112 = vmatpush.msra.mxu0 0.0
        %1113 = vmatpush.msra.mxu0 0.0
        %1114 = vmatpush.msra.mxu0 0.0
        %1115 = vmatpush.msra.mxu0 0.0
        %1116 = vmatpush.msra.mxu0 0.0
        %1117 = vmatpush.msra.mxu0 0.0
        %1118 = vmatpush.msra.mxu0 0.0
        %1119 = vmatpush.msra.mxu0 0.0
        %1120 = vmatpush.msra.mxu0 0.0
        %1121 = vmatpush.msra.mxu0 0.0
        %1122 = vmatpush.msra.mxu0 0.0
        %1123 = vmatpush.msra.mxu0 0.0
        %1124 = vmatpush.msra.mxu0 0.0
        %1125 = vmatpush.msra.mxu0 0.0
        %1126 = vmatpush.msra.mxu0 0.0
        %1127 = vmatpush.msra.mxu0 %v1075
        %1128 = vmatmul.f32.gmra.mxu0 %v405
        %v1129 = vpop.f32.mrf.mxu0
        %v1130 = vadd.f32 0.0, %v1129
        %1131 = vdwg.mxu0
        %s1132 = scalar_lea.vmem %s1, 128
        %v1133 = vld [vmem:[%s1132] sm:$0xff]
        %v1134 = vld [vmem:[%s1132 + $0x8] sm:$0xff]
        %v1135 = vld [vmem:[%s1132 + $0x10] sm:$0xff]
        %v1136 = vld [vmem:[%s1132 + $0x18] sm:$0xff]
        %v1137 = vld [vmem:[%s1132 + $0x20] sm:$0xff]
        %v1138 = vld [vmem:[%s1132 + $0x28] sm:$0xff]
        %v1139 = vld [vmem:[%s1132 + $0x30] sm:$0xff]
        %v1140 = vld [vmem:[%s1132 + $0x38] sm:$0xff]
        %s1141 = scalar_lea.vmem %s2, 128
        %v1142 = vld [vmem:[%s1141] sm:$0xff]
        %v1143 = vld [vmem:[%s1141 + $0x8] sm:$0xff]
        %v1144 = vld [vmem:[%s1141 + $0x10] sm:$0xff]
        %v1145 = vld [vmem:[%s1141 + $0x18] sm:$0xff]
        %v1146 = vld [vmem:[%s1141 + $0x20] sm:$0xff]
        %v1147 = vld [vmem:[%s1141 + $0x28] sm:$0xff]
        %v1148 = vld [vmem:[%s1141 + $0x30] sm:$0xff]
        %v1149 = vld [vmem:[%s1141 + $0x38] sm:$0xff]
        %1151 = vset.pattern.permute.xlu0 0
        %1152 = vperm.xlu0 %1151, %v1142
        %v1153 = vpop.permute.xlu0 %1152
        %1156 = vset.pattern.permute.xlu0 0
        %1157 = vperm.xlu0 %1156, %v1143
        %v1158 = vpop.permute.xlu0 %1157
        %1161 = vset.pattern.permute.xlu0 0
        %1162 = vperm.xlu0 %1161, %v1144
        %v1163 = vpop.permute.xlu0 %1162
        %1166 = vset.pattern.permute.xlu0 0
        %1167 = vperm.xlu0 %1166, %v1145
        %v1168 = vpop.permute.xlu0 %1167
        %1171 = vset.pattern.permute.xlu0 0
        %1172 = vperm.xlu0 %1171, %v1146
        %v1173 = vpop.permute.xlu0 %1172
        %1176 = vset.pattern.permute.xlu0 0
        %1177 = vperm.xlu0 %1176, %v1147
        %v1178 = vpop.permute.xlu0 %1177
        %1181 = vset.pattern.permute.xlu0 0
        %1182 = vperm.xlu0 %1181, %v1148
        %v1183 = vpop.permute.xlu0 %1182
        %1186 = vset.pattern.permute.xlu0 0
        %1187 = vperm.xlu0 %1186, %v1149
        %v1188 = vpop.permute.xlu0 %1187
        %v1191 = vsel %vm403, %v1133, 0
        %v1194 = vsel %vm403, %v1134, 0
        %v1197 = vsel %vm403, %v1135, 0
        %v1200 = vsel %vm403, %v1136, 0
        %v1203 = vsel %vm403, %v1137, 0
        %v1206 = vsel %vm403, %v1138, 0
        %v1209 = vsel %vm403, %v1139, 0
        %v1212 = vsel %vm403, %v1140, 0
        %1214 = vmatpush.msra.mxu0 0.0
        %1215 = vmatpush.msra.mxu0 0.0
        %1216 = vmatpush.msra.mxu0 0.0
        %1217 = vmatpush.msra.mxu0 0.0
        %1218 = vmatpush.msra.mxu0 0.0
        %1219 = vmatpush.msra.mxu0 0.0
        %1220 = vmatpush.msra.mxu0 0.0
        %1221 = vmatpush.msra.mxu0 0.0
        %1222 = vmatpush.msra.mxu0 0.0
        %1223 = vmatpush.msra.mxu0 0.0
        %1224 = vmatpush.msra.mxu0 0.0
        %1225 = vmatpush.msra.mxu0 0.0
        %1226 = vmatpush.msra.mxu0 0.0
        %1227 = vmatpush.msra.mxu0 0.0
        %1228 = vmatpush.msra.mxu0 0.0
        %1229 = vmatpush.msra.mxu0 %v1074
        %1230 = vmatmul.f32.gmra.mxu0 %v1191
        %v1231 = vpop.f32.mrf.mxu0
        %v1232 = vadd.f32 %v1153, %v1231
        %1233 = vmatmul.f32.gmra.mxu0 %v1194
        %v1234 = vpop.f32.mrf.mxu0
        %v1235 = vadd.f32 %v1158, %v1234
        %1236 = vmatmul.f32.gmra.mxu0 %v1197
        %v1237 = vpop.f32.mrf.mxu0
        %v1238 = vadd.f32 %v1163, %v1237
        %1239 = vmatmul.f32.gmra.mxu0 %v1200
        %v1240 = vpop.f32.mrf.mxu0
        %v1241 = vadd.f32 %v1168, %v1240
        %1242 = vmatmul.f32.gmra.mxu0 %v1203
        %v1243 = vpop.f32.mrf.mxu0
        %v1244 = vadd.f32 %v1173, %v1243
        %1245 = vmatmul.f32.gmra.mxu0 %v1206
        %v1246 = vpop.f32.mrf.mxu0
        %v1247 = vadd.f32 %v1178, %v1246
        %1248 = vmatmul.f32.gmra.mxu0 %v1209
        %v1249 = vpop.f32.mrf.mxu0
        %v1250 = vadd.f32 %v1183, %v1249
        %1251 = vmatmul.f32.gmra.mxu0 %v1212
        %v1252 = vpop.f32.mrf.mxu0
        %v1253 = vadd.f32 %v1188, %v1252
        %1254 = vdwg.mxu0
        %1255 = vmatpush.msra.mxu0 0.0
        %1256 = vmatpush.msra.mxu0 0.0
        %1257 = vmatpush.msra.mxu0 0.0
        %1258 = vmatpush.msra.mxu0 0.0
        %1259 = vmatpush.msra.mxu0 0.0
        %1260 = vmatpush.msra.mxu0 0.0
        %1261 = vmatpush.msra.mxu0 0.0
        %1262 = vmatpush.msra.mxu0 0.0
        %1263 = vmatpush.msra.mxu0 0.0
        %1264 = vmatpush.msra.mxu0 0.0
        %1265 = vmatpush.msra.mxu0 0.0
        %1266 = vmatpush.msra.mxu0 0.0
        %1267 = vmatpush.msra.mxu0 0.0
        %1268 = vmatpush.msra.mxu0 0.0
        %1269 = vmatpush.msra.mxu0 0.0
        %1270 = vmatpush.msra.mxu0 %v1075
        %1271 = vmatmul.f32.gmra.mxu0 %v1191
        %v1272 = vpop.f32.mrf.mxu0
        %v1273 = vadd.f32 %v1153, %v1272
        %1274 = vmatmul.f32.gmra.mxu0 %v1194
        %v1275 = vpop.f32.mrf.mxu0
        %v1276 = vadd.f32 %v1158, %v1275
        %1277 = vmatmul.f32.gmra.mxu0 %v1197
        %v1278 = vpop.f32.mrf.mxu0
        %v1279 = vadd.f32 %v1163, %v1278
        %1280 = vmatmul.f32.gmra.mxu0 %v1200
        %v1281 = vpop.f32.mrf.mxu0
        %v1282 = vadd.f32 %v1168, %v1281
        %1283 = vmatmul.f32.gmra.mxu0 %v1203
        %v1284 = vpop.f32.mrf.mxu0
        %v1285 = vadd.f32 %v1173, %v1284
        %1286 = vmatmul.f32.gmra.mxu0 %v1206
        %v1287 = vpop.f32.mrf.mxu0
        %v1288 = vadd.f32 %v1178, %v1287
        %1289 = vmatmul.f32.gmra.mxu0 %v1209
        %v1290 = vpop.f32.mrf.mxu0
        %v1291 = vadd.f32 %v1183, %v1290
        %1292 = vmatmul.f32.gmra.mxu0 %v1212
        %v1293 = vpop.f32.mrf.mxu0
        %v1294 = vadd.f32 %v1188, %v1293
        %1295 = vdwg.mxu0
        %vm1296 = vcmp.ge.f32.partialorder %v1232, 0.0
        %vm1297 = vcmp.ge.f32.partialorder %v1273, 0.0
        %vm1298 = vcmp.ge.f32.partialorder %v1235, 0.0
        %vm1299 = vcmp.ge.f32.partialorder %v1276, 0.0
        %vm1300 = vcmp.ge.f32.partialorder %v1238, 0.0
        %vm1301 = vcmp.ge.f32.partialorder %v1279, 0.0
        %vm1302 = vcmp.ge.f32.partialorder %v1241, 0.0
        %vm1303 = vcmp.ge.f32.partialorder %v1282, 0.0
        %vm1304 = vcmp.ge.f32.partialorder %v1244, 0.0
        %vm1305 = vcmp.ge.f32.partialorder %v1285, 0.0
        %vm1306 = vcmp.ge.f32.partialorder %v1247, 0.0
        %vm1307 = vcmp.ge.f32.partialorder %v1288, 0.0
        %vm1308 = vcmp.ge.f32.partialorder %v1250, 0.0
        %vm1309 = vcmp.ge.f32.partialorder %v1291, 0.0
        %vm1310 = vcmp.ge.f32.partialorder %v1253, 0.0
        %vm1311 = vcmp.ge.f32.partialorder %v1294, 0.0
        %v1312 = vmul.f32 %v1232, 0.2
        %v1313 = vmul.f32 %v1273, 0.2
        %v1314 = vmul.f32 %v1235, 0.2
        %v1315 = vmul.f32 %v1276, 0.2
        %v1316 = vmul.f32 %v1238, 0.2
        %v1317 = vmul.f32 %v1279, 0.2
        %v1318 = vmul.f32 %v1241, 0.2
        %v1319 = vmul.f32 %v1282, 0.2
        %v1320 = vmul.f32 %v1244, 0.2
        %v1321 = vmul.f32 %v1285, 0.2
        %v1322 = vmul.f32 %v1247, 0.2
        %v1323 = vmul.f32 %v1288, 0.2
        %v1324 = vmul.f32 %v1250, 0.2
        %v1325 = vmul.f32 %v1291, 0.2
        %v1326 = vmul.f32 %v1253, 0.2
        %v1327 = vmul.f32 %v1294, 0.2
        %v1328 = vsel %vm1296, %v1232, %v1312
        %v1329 = vsel %vm1297, %v1273, %v1313
        %v1330 = vsel %vm1298, %v1235, %v1314
        %v1331 = vsel %vm1299, %v1276, %v1315
        %v1332 = vsel %vm1300, %v1238, %v1316
        %v1333 = vsel %vm1301, %v1279, %v1317
        %v1334 = vsel %vm1302, %v1241, %v1318
        %v1335 = vsel %vm1303, %v1282, %v1319
        %v1336 = vsel %vm1304, %v1244, %v1320
        %v1337 = vsel %vm1305, %v1285, %v1321
        %v1338 = vsel %vm1306, %v1247, %v1322
        %v1339 = vsel %vm1307, %v1288, %v1323
        %v1340 = vsel %vm1308, %v1250, %v1324
        %v1341 = vsel %vm1309, %v1291, %v1325
        %v1342 = vsel %vm1310, %v1253, %v1326
        %v1343 = vsel %vm1311, %v1294, %v1327
        %s1344 = scalar_lea.vmem %s3, 32
        %v1345 = vld [vmem:[%s1344] sm:$0xff]
        %v1346 = vld [vmem:[%s1344 + $0x8] sm:$0xff]
        %s1347 = scalar_lea.vmem %s4, 32
        %v1348 = vld [vmem:[%s1347] sm:$0xff]
        %v1349 = vld [vmem:[%s1347 + $0x8] sm:$0xff]
        %1351 = vset.pattern.permute.xlu0 0
        %1352 = vperm.xlu0 %1351, %v1348
        %v1353 = vpop.permute.xlu0 %1352
        %1356 = vset.pattern.permute.xlu0 0
        %1357 = vperm.xlu0 %1356, %v1349
        %v1358 = vpop.permute.xlu0 %1357
        %v1361 = vsel %vm671, %v1345, 0
        %v1364 = vsel %vm671, %v1346, 0
        %1366 = vmatpush.msra.mxu0 0.0
        %1367 = vmatpush.msra.mxu0 0.0
        %1368 = vmatpush.msra.mxu0 0.0
        %1369 = vmatpush.msra.mxu0 0.0
        %1370 = vmatpush.msra.mxu0 0.0
        %1371 = vmatpush.msra.mxu0 0.0
        %1372 = vmatpush.msra.mxu0 0.0
        %1373 = vmatpush.msra.mxu0 0.0
        %1374 = vmatpush.msra.mxu0 %v1342
        %1375 = vmatpush.msra.mxu0 %v1340
        %1376 = vmatpush.msra.mxu0 %v1338
        %1377 = vmatpush.msra.mxu0 %v1336
        %1378 = vmatpush.msra.mxu0 %v1334
        %1379 = vmatpush.msra.mxu0 %v1332
        %1380 = vmatpush.msra.mxu0 %v1330
        %1381 = vmatpush.msra.mxu0 %v1328
        %1382 = vmatmul.f32.gmra.mxu0 %v1361
        %v1383 = vpop.f32.mrf.mxu0
        %v1384 = vadd.f32 %v1353, %v1383
        %1385 = vmatmul.f32.gmra.mxu0 %v1364
        %v1386 = vpop.f32.mrf.mxu0
        %v1387 = vadd.f32 %v1358, %v1386
        %1388 = vdwg.mxu0
        %1389 = vmatpush.msra.mxu0 0.0
        %1390 = vmatpush.msra.mxu0 0.0
        %1391 = vmatpush.msra.mxu0 0.0
        %1392 = vmatpush.msra.mxu0 0.0
        %1393 = vmatpush.msra.mxu0 0.0
        %1394 = vmatpush.msra.mxu0 0.0
        %1395 = vmatpush.msra.mxu0 0.0
        %1396 = vmatpush.msra.mxu0 0.0
        %1397 = vmatpush.msra.mxu0 %v1343
        %1398 = vmatpush.msra.mxu0 %v1341
        %1399 = vmatpush.msra.mxu0 %v1339
        %1400 = vmatpush.msra.mxu0 %v1337
        %1401 = vmatpush.msra.mxu0 %v1335
        %1402 = vmatpush.msra.mxu0 %v1333
        %1403 = vmatpush.msra.mxu0 %v1331
        %1404 = vmatpush.msra.mxu0 %v1329
        %1405 = vmatmul.f32.gmra.mxu0 %v1361
        %v1406 = vpop.f32.mrf.mxu0
        %v1407 = vadd.f32 %v1353, %v1406
        %1408 = vmatmul.f32.gmra.mxu0 %v1364
        %v1409 = vpop.f32.mrf.mxu0
        %v1410 = vadd.f32 %v1358, %v1409
        %1411 = vdwg.mxu0
        %v1412 = vmul.f32 %v1384, 1.442695
        %v1413 = vpow.pop %v1412
        %v1414 = vmul.f32 %v1407, 1.442695
        %v1415 = vpow.pop %v1414
        %v1416 = vmul.f32 %v1413, %v1110
        %v1417 = vmul.f32 %v1415, %v1130
        %v1418 = vadd.f32 %v1416, %v1387
        %v1419 = vadd.f32 %v1417, %v1410
        %v1420 = vrot.slane %v1384, 4
        %v1421 = vadd.f32 %v1384, %v1420
        %v1422 = vrot.slane %v1421, 2
        %v1423 = vadd.f32 %v1421, %v1422
        %v1424 = vrot.slane %v1423, 1
        %v1425 = vadd.f32 %v1423, %v1424
        %v1426 = vrot.slane %v1407, 4
        %v1427 = vadd.f32 %v1407, %v1426
        %v1428 = vrot.slane %v1427, 2
        %v1429 = vadd.f32 %v1427, %v1428
        %v1430 = vrot.slane %v1429, 1
        %v1431 = vadd.f32 %v1429, %v1430
        %v1432 = vadd.f32 %v1088, %v1425
        %v1433 = vadd.f32 %v1089, %v1431
        %1434 = vst [vmem:[%s374] sm:$0xff] %v1418
        %1435 = vst [vmem:[%s374 + $0x8] sm:$0xff] %v1419
        %1436 = vmatpush.msra.mxu0 0.0
        %1437 = vmatpush.msra.mxu0 0.0
        %1438 = vmatpush.msra.mxu0 0.0
        %1439 = vmatpush.msra.mxu0 0.0
        %1440 = vmatpush.msra.mxu0 0.0
        %1441 = vmatpush.msra.mxu0 0.0
        %1442 = vmatpush.msra.mxu0 0.0
        %1443 = vmatpush.msra.mxu0 0.0
        %1444 = vmatpush.msra.mxu0 0.0
        %1445 = vmatpush.msra.mxu0 0.0
        %1446 = vmatpush.msra.mxu0 0.0
        %1447 = vmatpush.msra.mxu0 0.0
        %1448 = vmatpush.msra.mxu0 0.0
        %1449 = vmatpush.msra.mxu0 0.0
        %1450 = vmatpush.msra.mxu0 0.0
        %1451 = vmatpush.msra.mxu0 %v1418
        %1452 = vmatmul.f32.gmra.mxu0 %v405
        %v1453 = vpop.f32.mrf.mxu0
        %v1454 = vadd.f32 0.0, %v1453
        %1455 = vdwg.mxu0
        %1456 = vmatpush.msra.mxu0 0.0
        %1457 = vmatpush.msra.mxu0 0.0
        %1458 = vmatpush.msra.mxu0 0.0
        %1459 = vmatpush.msra.mxu0 0.0
        %1460 = vmatpush.msra.mxu0 0.0
        %1461 = vmatpush.msra.mxu0 0.0
        %1462 = vmatpush.msra.mxu0 0.0
        %1463 = vmatpush.msra.mxu0 0.0
        %1464 = vmatpush.msra.mxu0 0.0
        %1465 = vmatpush.msra.mxu0 0.0
        %1466 = vmatpush.msra.mxu0 0.0
        %1467 = vmatpush.msra.mxu0 0.0
        %1468 = vmatpush.msra.mxu0 0.0
        %1469 = vmatpush.msra.mxu0 0.0
        %1470 = vmatpush.msra.mxu0 0.0
        %1471 = vmatpush.msra.mxu0 %v1419
        %1472 = vmatmul.f32.gmra.mxu0 %v405
        %v1473 = vpop.f32.mrf.mxu0
        %v1474 = vadd.f32 0.0, %v1473
        %1475 = vdwg.mxu0
        %s1476 = scalar_lea.vmem %s1, 192
        %v1477 = vld [vmem:[%s1476] sm:$0xff]
        %v1478 = vld [vmem:[%s1476 + $0x8] sm:$0xff]
        %v1479 = vld [vmem:[%s1476 + $0x10] sm:$0xff]
        %v1480 = vld [vmem:[%s1476 + $0x18] sm:$0xff]
        %v1481 = vld [vmem:[%s1476 + $0x20] sm:$0xff]
        %v1482 = vld [vmem:[%s1476 + $0x28] sm:$0xff]
        %v1483 = vld [vmem:[%s1476 + $0x30] sm:$0xff]
        %v1484 = vld [vmem:[%s1476 + $0x38] sm:$0xff]
        %s1485 = scalar_lea.vmem %s2, 192
        %v1486 = vld [vmem:[%s1485] sm:$0xff]
        %v1487 = vld [vmem:[%s1485 + $0x8] sm:$0xff]
        %v1488 = vld [vmem:[%s1485 + $0x10] sm:$0xff]
        %v1489 = vld [vmem:[%s1485 + $0x18] sm:$0xff]
        %v1490 = vld [vmem:[%s1485 + $0x20] sm:$0xff]
        %v1491 = vld [vmem:[%s1485 + $0x28] sm:$0xff]
        %v1492 = vld [vmem:[%s1485 + $0x30] sm:$0xff]
        %v1493 = vld [vmem:[%s1485 + $0x38] sm:$0xff]
        %1495 = vset.pattern.permute.xlu0 0
        %1496 = vperm.xlu0 %1495, %v1486
        %v1497 = vpop.permute.xlu0 %1496
        %1500 = vset.pattern.permute.xlu0 0
        %1501 = vperm.xlu0 %1500, %v1487
        %v1502 = vpop.permute.xlu0 %1501
        %1505 = vset.pattern.permute.xlu0 0
        %1506 = vperm.xlu0 %1505, %v1488
        %v1507 = vpop.permute.xlu0 %1506
        %1510 = vset.pattern.permute.xlu0 0
        %1511 = vperm.xlu0 %1510, %v1489
        %v1512 = vpop.permute.xlu0 %1511
        %1515 = vset.pattern.permute.xlu0 0
        %1516 = vperm.xlu0 %1515, %v1490
        %v1517 = vpop.permute.xlu0 %1516
        %1520 = vset.pattern.permute.xlu0 0
        %1521 = vperm.xlu0 %1520, %v1491
        %v1522 = vpop.permute.xlu0 %1521
        %1525 = vset.pattern.permute.xlu0 0
        %1526 = vperm.xlu0 %1525, %v1492
        %v1527 = vpop.permute.xlu0 %1526
        %1530 = vset.pattern.permute.xlu0 0
        %1531 = vperm.xlu0 %1530, %v1493
        %v1532 = vpop.permute.xlu0 %1531
        %v1535 = vsel %vm403, %v1477, 0
        %v1538 = vsel %vm403, %v1478, 0
        %v1541 = vsel %vm403, %v1479, 0
        %v1544 = vsel %vm403, %v1480, 0
        %v1547 = vsel %vm403, %v1481, 0
        %v1550 = vsel %vm403, %v1482, 0
        %v1553 = vsel %vm403, %v1483, 0
        %v1556 = vsel %vm403, %v1484, 0
        %1558 = vmatpush.msra.mxu0 0.0
        %1559 = vmatpush.msra.mxu0 0.0
        %1560 = vmatpush.msra.mxu0 0.0
        %1561 = vmatpush.msra.mxu0 0.0
        %1562 = vmatpush.msra.mxu0 0.0
        %1563 = vmatpush.msra.mxu0 0.0
        %1564 = vmatpush.msra.mxu0 0.0
        %1565 = vmatpush.msra.mxu0 0.0
        %1566 = vmatpush.msra.mxu0 0.0
        %1567 = vmatpush.msra.mxu0 0.0
        %1568 = vmatpush.msra.mxu0 0.0
        %1569 = vmatpush.msra.mxu0 0.0
        %1570 = vmatpush.msra.mxu0 0.0
        %1571 = vmatpush.msra.mxu0 0.0
        %1572 = vmatpush.msra.mxu0 0.0
        %1573 = vmatpush.msra.mxu0 %v1418
        %1574 = vmatmul.f32.gmra.mxu0 %v1535
        %v1575 = vpop.f32.mrf.mxu0
        %v1576 = vadd.f32 %v1497, %v1575
        %1577 = vmatmul.f32.gmra.mxu0 %v1538
        %v1578 = vpop.f32.mrf.mxu0
        %v1579 = vadd.f32 %v1502, %v1578
        %1580 = vmatmul.f32.gmra.mxu0 %v1541
        %v1581 = vpop.f32.mrf.mxu0
        %v1582 = vadd.f32 %v1507, %v1581
        %1583 = vmatmul.f32.gmra.mxu0 %v1544
        %v1584 = vpop.f32.mrf.mxu0
        %v1585 = vadd.f32 %v1512, %v1584
        %1586 = vmatmul.f32.gmra.mxu0 %v1547
        %v1587 = vpop.f32.mrf.mxu0
        %v1588 = vadd.f32 %v1517, %v1587
        %1589 = vmatmul.f32.gmra.mxu0 %v1550
        %v1590 = vpop.f32.mrf.mxu0
        %v1591 = vadd.f32 %v1522, %v1590
        %1592 = vmatmul.f32.gmra.mxu0 %v1553
        %v1593 = vpop.f32.mrf.mxu0
        %v1594 = vadd.f32 %v1527, %v1593
        %1595 = vmatmul.f32.gmra.mxu0 %v1556
        %v1596 = vpop.f32.mrf.mxu0
        %v1597 = vadd.f32 %v1532, %v1596
        %1598 = vdwg.mxu0
        %1599 = vmatpush.msra.mxu0 0.0
        %1600 = vmatpush.msra.mxu0 0.0
        %1601 = vmatpush.msra.mxu0 0.0
        %1602 = vmatpush.msra.mxu0 0.0
        %1603 = vmatpush.msra.mxu0 0.0
        %1604 = vmatpush.msra.mxu0 0.0
        %1605 = vmatpush.msra.mxu0 0.0
        %1606 = vmatpush.msra.mxu0 0.0
        %1607 = vmatpush.msra.mxu0 0.0
        %1608 = vmatpush.msra.mxu0 0.0
        %1609 = vmatpush.msra.mxu0 0.0
        %1610 = vmatpush.msra.mxu0 0.0
        %1611 = vmatpush.msra.mxu0 0.0
        %1612 = vmatpush.msra.mxu0 0.0
        %1613 = vmatpush.msra.mxu0 0.0
        %1614 = vmatpush.msra.mxu0 %v1419
        %1615 = vmatmul.f32.gmra.mxu0 %v1535
        %v1616 = vpop.f32.mrf.mxu0
        %v1617 = vadd.f32 %v1497, %v1616
        %1618 = vmatmul.f32.gmra.mxu0 %v1538
        %v1619 = vpop.f32.mrf.mxu0
        %v1620 = vadd.f32 %v1502, %v1619
        %1621 = vmatmul.f32.gmra.mxu0 %v1541
        %v1622 = vpop.f32.mrf.mxu0
        %v1623 = vadd.f32 %v1507, %v1622
        %1624 = vmatmul.f32.gmra.mxu0 %v1544
        %v1625 = vpop.f32.mrf.mxu0
        %v1626 = vadd.f32 %v1512, %v1625
        %1627 = vmatmul.f32.gmra.mxu0 %v1547
        %v1628 = vpop.f32.mrf.mxu0
        %v1629 = vadd.f32 %v1517, %v1628
        %1630 = vmatmul.f32.gmra.mxu0 %v1550
        %v1631 = vpop.f32.mrf.mxu0
        %v1632 = vadd.f32 %v1522, %v1631
        %1633 = vmatmul.f32.gmra.mxu0 %v1553
        %v1634 = vpop.f32.mrf.mxu0
        %v1635 = vadd.f32 %v1527, %v1634
        %1636 = vmatmul.f32.gmra.mxu0 %v1556
        %v1637 = vpop.f32.mrf.mxu0
        %v1638 = vadd.f32 %v1532, %v1637
        %1639 = vdwg.mxu0
        %vm1640 = vcmp.ge.f32.partialorder %v1576, 0.0
        %vm1641 = vcmp.ge.f32.partialorder %v1617, 0.0
        %vm1642 = vcmp.ge.f32.partialorder %v1579, 0.0
        %vm1643 = vcmp.ge.f32.partialorder %v1620, 0.0
        %vm1644 = vcmp.ge.f32.partialorder %v1582, 0.0
        %vm1645 = vcmp.ge.f32.partialorder %v1623, 0.0
        %vm1646 = vcmp.ge.f32.partialorder %v1585, 0.0
        %vm1647 = vcmp.ge.f32.partialorder %v1626, 0.0
        %vm1648 = vcmp.ge.f32.partialorder %v1588, 0.0
        %vm1649 = vcmp.ge.f32.partialorder %v1629, 0.0
        %vm1650 = vcmp.ge.f32.partialorder %v1591, 0.0
        %vm1651 = vcmp.ge.f32.partialorder %v1632, 0.0
        %vm1652 = vcmp.ge.f32.partialorder %v1594, 0.0
        %vm1653 = vcmp.ge.f32.partialorder %v1635, 0.0
        %vm1654 = vcmp.ge.f32.partialorder %v1597, 0.0
        %vm1655 = vcmp.ge.f32.partialorder %v1638, 0.0
        %v1656 = vmul.f32 %v1576, 0.2
        %v1657 = vmul.f32 %v1617, 0.2
        %v1658 = vmul.f32 %v1579, 0.2
        %v1659 = vmul.f32 %v1620, 0.2
        %v1660 = vmul.f32 %v1582, 0.2
        %v1661 = vmul.f32 %v1623, 0.2
        %v1662 = vmul.f32 %v1585, 0.2
        %v1663 = vmul.f32 %v1626, 0.2
        %v1664 = vmul.f32 %v1588, 0.2
        %v1665 = vmul.f32 %v1629, 0.2
        %v1666 = vmul.f32 %v1591, 0.2
        %v1667 = vmul.f32 %v1632, 0.2
        %v1668 = vmul.f32 %v1594, 0.2
        %v1669 = vmul.f32 %v1635, 0.2
        %v1670 = vmul.f32 %v1597, 0.2
        %v1671 = vmul.f32 %v1638, 0.2
        %v1672 = vsel %vm1640, %v1576, %v1656
        %v1673 = vsel %vm1641, %v1617, %v1657
        %v1674 = vsel %vm1642, %v1579, %v1658
        %v1675 = vsel %vm1643, %v1620, %v1659
        %v1676 = vsel %vm1644, %v1582, %v1660
        %v1677 = vsel %vm1645, %v1623, %v1661
        %v1678 = vsel %vm1646, %v1585, %v1662
        %v1679 = vsel %vm1647, %v1626, %v1663
        %v1680 = vsel %vm1648, %v1588, %v1664
        %v1681 = vsel %vm1649, %v1629, %v1665
        %v1682 = vsel %vm1650, %v1591, %v1666
        %v1683 = vsel %vm1651, %v1632, %v1667
        %v1684 = vsel %vm1652, %v1594, %v1668
        %v1685 = vsel %vm1653, %v1635, %v1669
        %v1686 = vsel %vm1654, %v1597, %v1670
        %v1687 = vsel %vm1655, %v1638, %v1671
        %s1688 = scalar_lea.vmem %s3, 48
        %v1689 = vld [vmem:[%s1688] sm:$0xff]
        %v1690 = vld [vmem:[%s1688 + $0x8] sm:$0xff]
        %s1691 = scalar_lea.vmem %s4, 48
        %v1692 = vld [vmem:[%s1691] sm:$0xff]
        %v1693 = vld [vmem:[%s1691 + $0x8] sm:$0xff]
        %1695 = vset.pattern.permute.xlu0 0
        %1696 = vperm.xlu0 %1695, %v1692
        %v1697 = vpop.permute.xlu0 %1696
        %1700 = vset.pattern.permute.xlu0 0
        %1701 = vperm.xlu0 %1700, %v1693
        %v1702 = vpop.permute.xlu0 %1701
        %v1705 = vsel %vm671, %v1689, 0
        %v1708 = vsel %vm671, %v1690, 0
        %1710 = vmatpush.msra.mxu0 0.0
        %1711 = vmatpush.msra.mxu0 0.0
        %1712 = vmatpush.msra.mxu0 0.0
        %1713 = vmatpush.msra.mxu0 0.0
        %1714 = vmatpush.msra.mxu0 0.0
        %1715 = vmatpush.msra.mxu0 0.0
        %1716 = vmatpush.msra.mxu0 0.0
        %1717 = vmatpush.msra.mxu0 0.0
        %1718 = vmatpush.msra.mxu0 %v1686
        %1719 = vmatpush.msra.mxu0 %v1684
        %1720 = vmatpush.msra.mxu0 %v1682
        %1721 = vmatpush.msra.mxu0 %v1680
        %1722 = vmatpush.msra.mxu0 %v1678
        %1723 = vmatpush.msra.mxu0 %v1676
        %1724 = vmatpush.msra.mxu0 %v1674
        %1725 = vmatpush.msra.mxu0 %v1672
        %1726 = vmatmul.f32.gmra.mxu0 %v1705
        %v1727 = vpop.f32.mrf.mxu0
        %v1728 = vadd.f32 %v1697, %v1727
        %1729 = vmatmul.f32.gmra.mxu0 %v1708
        %v1730 = vpop.f32.mrf.mxu0
        %v1731 = vadd.f32 %v1702, %v1730
        %1732 = vdwg.mxu0
        %1733 = vmatpush.msra.mxu0 0.0
        %1734 = vmatpush.msra.mxu0 0.0
        %1735 = vmatpush.msra.mxu0 0.0
        %1736 = vmatpush.msra.mxu0 0.0
        %1737 = vmatpush.msra.mxu0 0.0
        %1738 = vmatpush.msra.mxu0 0.0
        %1739 = vmatpush.msra.mxu0 0.0
        %1740 = vmatpush.msra.mxu0 0.0
        %1741 = vmatpush.msra.mxu0 %v1687
        %1742 = vmatpush.msra.mxu0 %v1685
        %1743 = vmatpush.msra.mxu0 %v1683
        %1744 = vmatpush.msra.mxu0 %v1681
        %1745 = vmatpush.msra.mxu0 %v1679
        %1746 = vmatpush.msra.mxu0 %v1677
        %1747 = vmatpush.msra.mxu0 %v1675
        %1748 = vmatpush.msra.mxu0 %v1673
        %1749 = vmatmul.f32.gmra.mxu0 %v1705
        %v1750 = vpop.f32.mrf.mxu0
        %v1751 = vadd.f32 %v1697, %v1750
        %1752 = vmatmul.f32.gmra.mxu0 %v1708
        %v1753 = vpop.f32.mrf.mxu0
        %v1754 = vadd.f32 %v1702, %v1753
        %1755 = vdwg.mxu0
        %v1756 = vmul.f32 %v1728, 1.442695
        %v1757 = vpow.pop %v1756
        %v1758 = vmul.f32 %v1751, 1.442695
        %v1759 = vpow.pop %v1758
        %v1760 = vmul.f32 %v1757, %v1454
        %v1761 = vmul.f32 %v1759, %v1474
        %v1762 = vadd.f32 %v1760, %v1731
        %v1763 = vadd.f32 %v1761, %v1754
        %v1764 = vrot.slane %v1728, 4
        %v1765 = vadd.f32 %v1728, %v1764
        %v1766 = vrot.slane %v1765, 2
        %v1767 = vadd.f32 %v1765, %v1766
        %v1768 = vrot.slane %v1767, 1
        %v1769 = vadd.f32 %v1767, %v1768
        %v1770 = vrot.slane %v1751, 4
        %v1771 = vadd.f32 %v1751, %v1770
        %v1772 = vrot.slane %v1771, 2
        %v1773 = vadd.f32 %v1771, %v1772
        %v1774 = vrot.slane %v1773, 1
        %v1775 = vadd.f32 %v1773, %v1774
        %v1776 = vadd.f32 %v1432, %v1769
        %v1777 = vadd.f32 %v1433, %v1775
        %1778 = vst [vmem:[%s381] sm:$0xff] %v1762
        %1779 = vst [vmem:[%s381 + $0x8] sm:$0xff] %v1763
        %v1782 = vrot.slane %v1777, 7
        %vm1783 = vcmask 1040384
        %v1784 = vsel %vm1783, %v1776, %v1782
        %v1786 = vlaneseq
        %vm1787 = vcmp.ge.s32.totalorder %v1786, 0
        %vm1788 = vcmp.lt.s32.totalorder %v1786, 256
        %vm1789 = vmand %vm1787, %vm1788
        %1790 = vst.msk [vmem:[%s388] sm:$0x3] %vm1789, %v1784
        %s1791 = sand.u32 %s170, 1
        %s1792 = scalar_lea.sflag [#allocation3], %s1791
        %s1793 = sand.u32 %s170, 1
        %s1794 = smul.addr %s1793, 16
        %s1795 = scalar_lea.vmem [#allocation2], %s1794
        %s1796 = sand.u32 %s31, 1
        %s1797 = scalar_lea.sflag [#allocation5], %s1796
        %s1798 = sand.u32 %s196, 1
        %s1799 = smul.addr %s1798, 16
        %s1800 = scalar_lea.vmem [#allocation4], %s1799
        %s1801 = sand.u32 %s31, 1
        %s1802 = scalar_lea.sflag [#allocation5], %s1801
        %s1803 = sand.u32 %s222, 1
        %s1804 = smul.addr %s1803, 16
        %s1805 = scalar_lea.vmem [#allocation6], %s1804
        %s1806 = sand.u32 %s31, 1
        %s1807 = scalar_lea.sflag [#allocation8], %s1806
        %s1808 = sand.u32 %s248, 1
        %s1809 = smul.addr %s1808, 16
        %s1810 = scalar_lea.vmem [#allocation7], %s1809
        %s1811 = sand.u32 %s31, 1
        %s1812 = scalar_lea.sflag [#allocation8], %s1811
        %s1813 = sand.u32 %s274, 1
        %s1814 = smul.addr %s1813, 2
        %s1815 = scalar_lea.vmem [#allocation9], %s1814
        // Predicated region
        $region45: #{tpu_custom_call.1} parent=43 // pred_check
          %p1816 = pneg %p180
        $region46: #{tpu_custom_call.1} parent=43 // pred_check_branch
          %1818 = sbr.rel (%p1816) target = $region48
        $region47: #{tpu_custom_call.1} parent=43 // pred_region
          %s1819 = smul.u32 2, %s31
          %1821 = vsyncadd %s1792, 0
          %s1822 = smul.addr %s1819, 8
          %s1823 = scalar_lea.hbm %s6, %s1822
          %s1825 = sshll.u32 %s1795, 4
          %s1826 = int_to_ptr.vmem [resolvable:$true] %s1825
          %s1827 = sshll.u32 %s1823, 4
          %s1828 = int_to_ptr.hbm [resolvable:$true] %s1827
          %1830 = dma.vmem_to_hbm [thread:$0]  %s1826, 256, %s1828, %s1792
        $region48: #{tpu_custom_call.1} parent=43 // pred_fallthru
          _
        // Predicated region
        $region49: #{tpu_custom_call.1} parent=43 // pred_check
          %p1831 = pneg %p206
        $region50: #{tpu_custom_call.1} parent=43 // pred_check_branch
          %1833 = sbr.rel (%p1831) target = $region52
        $region51: #{tpu_custom_call.1} parent=43 // pred_region
          %s1834 = smul.u32 2, %s31
          %1836 = vsyncadd %s1797, 0
          %s1837 = smul.addr %s1834, 8
          %s1838 = scalar_lea.hbm %s7, %s1837
          %s1840 = sshll.u32 %s1800, 4
          %s1841 = int_to_ptr.vmem [resolvable:$true] %s1840
          %s1842 = sshll.u32 %s1838, 4
          %s1843 = int_to_ptr.hbm [resolvable:$true] %s1842
          %1845 = dma.vmem_to_hbm [thread:$0]  %s1841, 256, %s1843, %s1797
        $region52: #{tpu_custom_call.1} parent=43 // pred_fallthru
          _
        // Predicated region
        $region53: #{tpu_custom_call.1} parent=43 // pred_check
          %p1846 = pneg %p232
        $region54: #{tpu_custom_call.1} parent=43 // pred_check_branch
          %1848 = sbr.rel (%p1846) target = $region56
        $region55: #{tpu_custom_call.1} parent=43 // pred_region
          %s1849 = smul.u32 2, %s31
          %1851 = vsyncadd %s1802, 0
          %s1852 = smul.addr %s1849, 8
          %s1853 = scalar_lea.hbm %s8, %s1852
          %s1855 = sshll.u32 %s1805, 4
          %s1856 = int_to_ptr.vmem [resolvable:$true] %s1855
          %s1857 = sshll.u32 %s1853, 4
          %s1858 = int_to_ptr.hbm [resolvable:$true] %s1857
          %1860 = dma.vmem_to_hbm [thread:$0]  %s1856, 256, %s1858, %s1802
        $region56: #{tpu_custom_call.1} parent=43 // pred_fallthru
          _
        // Predicated region
        $region57: #{tpu_custom_call.1} parent=43 // pred_check
          %p1861 = pneg %p258
        $region58: #{tpu_custom_call.1} parent=43 // pred_check_branch
          %1863 = sbr.rel (%p1861) target = $region60
        $region59: #{tpu_custom_call.1} parent=43 // pred_region
          %s1864 = smul.u32 2, %s31
          %1866 = vsyncadd %s1807, 0
          %s1867 = smul.addr %s1864, 8
          %s1868 = scalar_lea.hbm %s9, %s1867
          %s1870 = sshll.u32 %s1810, 4
          %s1871 = int_to_ptr.vmem [resolvable:$true] %s1870
          %s1872 = sshll.u32 %s1868, 4
          %s1873 = int_to_ptr.hbm [resolvable:$true] %s1872
          %1875 = dma.vmem_to_hbm [thread:$0]  %s1871, 256, %s1873, %s1807
        $region60: #{tpu_custom_call.1} parent=43 // pred_fallthru
          _
        // Predicated region
        $region61: #{tpu_custom_call.1} parent=43 // pred_check
          %p1876 = pneg %p284
        $region62: #{tpu_custom_call.1} parent=43 // pred_check_branch
          %1878 = sbr.rel (%p1876) target = $region64
        $region63: #{tpu_custom_call.1} parent=43 // pred_region
          %s1879 = smul.u32 2, %s31
          %1881 = vsyncadd %s1812, 0
          %s1882 = scalar_lea.hbm %s10, %s1879
          %s1884 = sshll.u32 %s1815, 4
          %s1885 = int_to_ptr.vmem [resolvable:$true] %s1884
          %s1886 = sshll.u32 %s1882, 4
          %s1887 = int_to_ptr.hbm [resolvable:$true] %s1886
          %1889 = dma.vmem_to_hbm [thread:$0]  %s1885, 32, %s1887, %s1812
        $region64: #{tpu_custom_call.1} parent=43 // pred_fallthru
          _
      $region44: #{tpu_custom_call.1} parent=5 // pred_fallthru
        _
      %p1890 = scmp.le.s32.totalorder 2, %s26
      // Predicated region
      $region65: #{tpu_custom_call.1} parent=5 // pred_check
        %p1891 = pneg %p1890
      $region66: #{tpu_custom_call.1} parent=5 // pred_check_branch
        %1893 = sbr.rel (%p1891) target = $region68
      $region67: #{tpu_custom_call.1} parent=5 // pred_region
        %s1894 = ssub.s32 %s26, 2
        // Predicated region
        $region69: #{tpu_custom_call.1} parent=67 // pred_check
          %p1895 = pneg %p186
        $region70: #{tpu_custom_call.1} parent=67 // pred_check_branch
          %1897 = sbr.rel (%p1895) target = $region72
        $region71: #{tpu_custom_call.1} parent=67 // pred_region
          %s1898 = sand.u32 %s171, 1
          %s1899 = scalar_lea.sflag [#allocation3], %s1898
          %s1900 = sand.u32 %s171, 1
          %s1901 = smul.addr %s1900, 16
          %s1902 = scalar_lea.vmem [#allocation2], %s1901
          %1904 = dma.done %s1899, 256
        $region72: #{tpu_custom_call.1} parent=67 // pred_fallthru
          _
        // Predicated region
        $region73: #{tpu_custom_call.1} parent=67 // pred_check
          %p1905 = pneg %p212
        $region74: #{tpu_custom_call.1} parent=67 // pred_check_branch
          %1907 = sbr.rel (%p1905) target = $region76
        $region75: #{tpu_custom_call.1} parent=67 // pred_region
          %s1908 = sand.u32 %s32, 1
          %s1909 = scalar_lea.sflag [#allocation5], %s1908
          %s1910 = sand.u32 %s197, 1
          %s1911 = smul.addr %s1910, 16
          %s1912 = scalar_lea.vmem [#allocation4], %s1911
          %1914 = dma.done %s1909, 256
        $region76: #{tpu_custom_call.1} parent=67 // pred_fallthru
          _
        // Predicated region
        $region77: #{tpu_custom_call.1} parent=67 // pred_check
          %p1915 = pneg %p238
        $region78: #{tpu_custom_call.1} parent=67 // pred_check_branch
          %1917 = sbr.rel (%p1915) target = $region80
        $region79: #{tpu_custom_call.1} parent=67 // pred_region
          %s1918 = sand.u32 %s32, 1
          %s1919 = scalar_lea.sflag [#allocation5], %s1918
          %s1920 = sand.u32 %s223, 1
          %s1921 = smul.addr %s1920, 16
          %s1922 = scalar_lea.vmem [#allocation6], %s1921
          %1924 = dma.done %s1919, 256
        $region80: #{tpu_custom_call.1} parent=67 // pred_fallthru
          _
        // Predicated region
        $region81: #{tpu_custom_call.1} parent=67 // pred_check
          %p1925 = pneg %p264
        $region82: #{tpu_custom_call.1} parent=67 // pred_check_branch
          %1927 = sbr.rel (%p1925) target = $region84
        $region83: #{tpu_custom_call.1} parent=67 // pred_region
          %s1928 = sand.u32 %s32, 1
          %s1929 = scalar_lea.sflag [#allocation8], %s1928
          %s1930 = sand.u32 %s249, 1
          %s1931 = smul.addr %s1930, 16
          %s1932 = scalar_lea.vmem [#allocation7], %s1931
          %1934 = dma.done %s1929, 256
        $region84: #{tpu_custom_call.1} parent=67 // pred_fallthru
          _
        // Predicated region
        $region85: #{tpu_custom_call.1} parent=67 // pred_check
          %p1935 = pneg %p290
        $region86: #{tpu_custom_call.1} parent=67 // pred_check_branch
          %1937 = sbr.rel (%p1935) target = $region88
        $region87: #{tpu_custom_call.1} parent=67 // pred_region
          %s1938 = sand.u32 %s32, 1
          %s1939 = scalar_lea.sflag [#allocation8], %s1938
          %s1940 = sand.u32 %s275, 1
          %s1941 = smul.addr %s1940, 2
          %s1942 = scalar_lea.vmem [#allocation9], %s1941
          %1944 = dma.done %s1939, 32
        $region88: #{tpu_custom_call.1} parent=67 // pred_fallthru
          _
      $region68: #{tpu_custom_call.1} parent=5 // pred_fallthru
        _
    $region6: #{tpu_custom_call.1} parent=1 // loop_footer
      %s30 = sadd.s32 1, %s26
    $region7: #{tpu_custom_call.1} parent=1 // loop_footer_branch
      %25 = sbr.rel target = $region3
    $region8: #{tpu_custom_call.1} parent=1 // loop_exit
      _
    %1945 = vsyncpa [#allocation3], 1
    %s1946 = scalar_lea.sflag [#allocation3], 1
    %1947 = vsyncpa %s1946, 1
    %1948 = vsyncpa [#allocation5], 1
    %s1949 = scalar_lea.sflag [#allocation5], 1
    %1950 = vsyncpa %s1949, 1
    %1951 = vsyncpa [#allocation8], 1
    %s1952 = scalar_lea.sflag [#allocation8], 1
    %1953 = vsyncpa %s1952, 1

</llo_original>
